<compile_context>
chip_gen: v7x
topology: tpu7x:2x2x1
jax: 0.10.0
libtpu: 0.0.40
codegen_flags: <defaults>
</compile_context>

<pallas_src>
import functools

import jax
import jax.numpy as jnp
from jax import lax
from jax.experimental import pallas as pl
from jax.experimental.pallas import tpu as pltpu

_SUBLANES = 8
_MIN_PALLAS_ELEMS = 16384        # below this, launch overhead dominates -> pure JAX
_TARGET_STEP_BYTES = 8 << 20     # HBM bytes streamed per grid step (all streams)
_CHUNK_TEMP_BYTES = 512 << 10    # bound on f32 temporaries per in-kernel chunk
_VMEM_CEILING = 44 << 20         # stay well under v7x's 64 MiB physical VMEM


def _cdiv(a, b):
    return -(-a // b)


def _num_partials():
    """2 partial accumulators on dual-TensorCore chips, 1 on single-TC chips."""
    try:
        kind = jax.devices()[0].device_kind.lower()
    except Exception:
        return 2
    if any(tag in kind for tag in ("v5 lite", "v5e", "v6 lite", "v6e")):
        return 1
    return 2


def _accum_wsq(x_ref, t_ref, w_ref, o_ref, *, inner, tile_m, chunk_rows,
               valid_rows):
    """Scalar / per-feature sigma path: accumulate sum over rows of (t-x)^2 * w."""
    p = pl.program_id(0)
    i = pl.program_id(1)
    blk = p * inner + i
    base = blk * tile_m

    @pl.when(i == 0)
    def _init():
        o_ref[...] = jnp.zeros_like(o_ref)

    w = w_ref[...]                                   # (1, D) f32, row-broadcast
    n_chunks = tile_m // chunk_rows
    groups = chunk_rows // _SUBLANES

    def run(masked):
        @pl.loop(0, n_chunks)
        def _chunk(c):
            r0 = pl.multiple_of(c * chunk_rows, chunk_rows)
            xb = x_ref[pl.ds(r0, chunk_rows), :].astype(jnp.float32)
            tb = t_ref[pl.ds(r0, chunk_rows), :].astype(jnp.float32)
            diff = tb - xb
            if masked:
                rows = (base + r0) + lax.broadcasted_iota(jnp.int32, diff.shape, 0)
                diff = jnp.where(rows < valid_rows, diff, 0.0)
            contrib = diff * diff * w
            o_ref[...] += contrib.reshape(groups, _SUBLANES, -1).sum(axis=0)

    full = (blk + 1) * tile_m <= valid_rows
    pl.when(full)(lambda: run(False))
    pl.when(jnp.logical_not(full))(lambda: run(True))


def _accum_nll(x_ref, t_ref, s_ref, o_ref, *, inner, tile_m, chunk_rows,
               valid_rows, no_dim):
    """Per-element sigma path: accumulate no_dim*log(s) + 0.5*(t-x)^2 / s^2."""
    p = pl.program_id(0)
    i = pl.program_id(1)
    blk = p * inner + i
    base = blk * tile_m

    @pl.when(i == 0)
    def _init():
        o_ref[...] = jnp.zeros_like(o_ref)

    n_chunks = tile_m // chunk_rows
    groups = chunk_rows // _SUBLANES
    half = jnp.float32(0.5)
    nd = jnp.float32(no_dim)

    def run(masked):
        @pl.loop(0, n_chunks)
        def _chunk(c):
            r0 = pl.multiple_of(c * chunk_rows, chunk_rows)
            xb = x_ref[pl.ds(r0, chunk_rows), :].astype(jnp.float32)
            tb = t_ref[pl.ds(r0, chunk_rows), :].astype(jnp.float32)
            sb = s_ref[pl.ds(r0, chunk_rows), :].astype(jnp.float32)
            diff = tb - xb
            # Exact reciprocal keeps reference-level accuracy; approx=True
            # would move it fully onto the EUP at ~2^-12 relative error.
            inv_s2 = pl.reciprocal(sb * sb, approx=False)
            contrib = nd * jnp.log(sb) + half * (diff * diff) * inv_s2
            if masked:
                rows = (base + r0) + lax.broadcasted_iota(jnp.int32,
                                                          contrib.shape, 0)
                contrib = jnp.where(rows < valid_rows, contrib, 0.0)
            o_ref[...] += contrib.reshape(groups, _SUBLANES, -1).sum(axis=0)

    full = (blk + 1) * tile_m <= valid_rows
    pl.when(full)(lambda: run(False))
    pl.when(jnp.logical_not(full))(lambda: run(True))


def elbo_regression_ref(x, target, sigma, no_dim, kl, *, train_size,
                        kl_weight=0.1):
    """Pure-JAX reference mirroring the PyTorch module."""
    x = jnp.asarray(x, jnp.float32)
    target = jnp.asarray(target, jnp.float32)
    sigma = jnp.broadcast_to(jnp.asarray(sigma, jnp.float32), x.shape)
    exponent = -0.5 * (target - x) ** 2 / sigma ** 2
    log_coeff = -no_dim * jnp.log(sigma)
    nll = -(log_coeff + exponent).sum()
    return (nll * jnp.float32(train_size)
            + jnp.float32(kl_weight) * jnp.asarray(kl, jnp.float32))


def elbo_regression(x, target, sigma, no_dim, kl, *, train_size,
                    kl_weight=0.1):
    """Pallas implementation of ELBO_regression.forward."""
    # NOTE: `assert not target.requires_grad` is autograd bookkeeping with no
    # JAX/Pallas equivalent; forward math below matches the module exactly.
    x = jnp.asarray(x)
    target = jnp.asarray(target)
    sigma = jnp.asarray(sigma)
    no_dim = float(no_dim)

    count = x.size
    if count == 0 or count < _MIN_PALLAS_ELEMS:
        # Tiny / empty inputs: kernel launch + tiling overhead dominates.
        return elbo_regression_ref(x, target, sigma, no_dim, kl,
                                   train_size=train_size, kl_weight=kl_weight)

    orig_shape = x.shape
    if x.ndim == 1:
        x2, t2 = x.reshape(1, -1), target.reshape(1, -1)
    elif x.ndim == 2:
        x2, t2 = x, target
    else:
        # Collapse leading dims; layout-preserving when trailing dims are
        # tile-friendly, otherwise XLA inserts a single relayout (still far
        # cheaper than the old pad + cast + broadcast passes).
        x2 = x.reshape(-1, x.shape[-1])
        t2 = target.reshape(-1, target.shape[-1])
    M, D = x2.shape

    # ---- sigma dispatch (avoid materializing a broadcast sigma stream) ------
    if sigma.size == 1:
        mode = "const"
        s_feat = jnp.broadcast_to(sigma.reshape(1, 1).astype(jnp.float32), (1, D))
    elif sigma.size == D and sigma.shape[-1] == D:
        mode = "const"                      # per-feature sigma
        s_feat = sigma.reshape(1, D).astype(jnp.float32)
    elif sigma.shape == orig_shape:
        mode = "full"
        s2d = sigma.reshape(M, D)
    else:
        # TODO(synk): per-row / exotic broadcast shapes still materialize a
        # full sigma stream; they could be folded analytically like the
        # scalar / per-feature cases.
        mode = "full"
        s2d = jnp.broadcast_to(sigma, orig_shape).reshape(M, D)

    itemsizes = [x2.dtype.itemsize, t2.dtype.itemsize]
    if mode == "full":
        itemsizes.append(s2d.dtype.itemsize)

    # ---- tiling --------------------------------------------------------------
    num_partials = _num_partials()
    row_bytes = D * sum(itemsizes)                    # HBM bytes per row
    tile_m = max(_SUBLANES,
                 (_TARGET_STEP_BYTES // row_bytes) // _SUBLANES * _SUBLANES)
    tile_m = min(tile_m, _cdiv(_cdiv(M, num_partials), _SUBLANES) * _SUBLANES)
    chunk_rows = max(_SUBLANES,
                     min(tile_m,
                         (_CHUNK_TEMP_BYTES // (D * 4)) // _SUBLANES * _SUBLANES))
    tile_m = max(chunk_rows, (tile_m // chunk_rows) * chunk_rows)

    n_blocks = _cdiv(M, tile_m)
    num_partials = min(num_partials, n_blocks)
    inner = _cdiv(n_blocks, num_partials)
    grid = (num_partials, inner)

    # ---- VMEM budget (double-buffered streams + bounded f32 temps) ----------
    vmem_bytes = 2 * tile_m * row_bytes               # pipelined input streams
    vmem_bytes += 2 * _SUBLANES * D * 4               # accumulator block
    vmem_bytes += 2 * D * 4                           # constant weight block
    vmem_bytes += 6 * chunk_rows * D * 4              # elementwise f32 temps
    vmem_limit = max(vmem_bytes + (4 << 20), 16 << 20)
    if vmem_limit > _VMEM_CEILING:
        # TODO(synk): extremely wide feature dims would additionally need lane
        # tiling inside the kernel; fall back to the fused XLA reduction.
        return elbo_regression_ref(x, target, sigma, no_dim, kl,
                                   train_size=train_size, kl_weight=kl_weight)

    last_blk = n_blocks - 1

    def row_map(p, i):
        # Clamp so the DMA never walks past the last row block; blocks whose
        # logical index is out of range are fully masked inside the kernel.
        return (jnp.minimum(p * inner + i, last_blk), 0)

    row_spec = pl.BlockSpec((tile_m, D), row_map)
    out_spec = pl.BlockSpec((_SUBLANES, D), lambda p, i: (p, 0))
    out_shape = jax.ShapeDtypeStruct((num_partials * _SUBLANES, D), jnp.float32)
    cparams = pltpu.CompilerParams(
        dimension_semantics=("parallel", "arbitrary"),
        vmem_limit_bytes=int(vmem_limit),
    )

    if mode == "const":
        w = jnp.float32(0.5) / (s_feat * s_feat)       # (1, D) weights, tiny
        kernel = functools.partial(_accum_wsq, inner=inner, tile_m=tile_m,
                                   chunk_rows=chunk_rows, valid_rows=M)
        partials = pl.pallas_call(
            kernel,
            out_shape=out_shape,
            grid_spec=pltpu.PrefetchScalarGridSpec(
                num_scalar_prefetch=0,
                grid=grid,
                in_specs=[row_spec, row_spec,
                          pl.BlockSpec((1, D), lambda p, i: (0, 0))],
                out_specs=out_spec,
            ),
            compiler_params=cparams,
        )(x2, t2, w)
        # -no_dim * log(sigma) summed over real elements, folded analytically.
        nll = (jnp.sum(partials)
               + jnp.float32(no_dim * M) * jnp.sum(jnp.log(s_feat)))
    else:
        kernel = functools.partial(_accum_nll, inner=inner, tile_m=tile_m,
                                   chunk_rows=chunk_rows, valid_rows=M,
                                   no_dim=no_dim)
        partials = pl.pallas_call(
            kernel,
            out_shape=out_shape,
            grid_spec=pltpu.PrefetchScalarGridSpec(
                num_scalar_prefetch=0,
                grid=grid,
                in_specs=[row_spec, row_spec, row_spec],
                out_specs=out_spec,
            ),
            compiler_params=cparams,
        )(x2, t2, s2d)
        nll = jnp.sum(partials)

    return (nll * jnp.float32(train_size)
            + jnp.float32(kl_weight) * jnp.asarray(kl, jnp.float32))


if __name__ == "__main__":
    key = jax.random.PRNGKey(0)
    ks = jax.random.split(key, 6)

    # Non-lane-aligned feature dim + row count that exercises the ragged-tail
    # masking and (on dual-TC chips) the clamped out-of-range block path.
    M, D = 522, 130
    train_size = 1000
    no_dim = 1.0
    kl_weight = 0.1

    x = jax.random.normal(ks[0], (M, D), jnp.float32)
    t = jax.random.normal(ks[1], (M, D), jnp.float32)
    sigma_el = 0.5 + jax.random.uniform(ks[2], (M, D), jnp.float32)
    sigma_feat = 0.5 + jax.random.uniform(ks[3], (D,), jnp.float32)
    sigma_sc = jnp.float32(0.7)
    kl = jax.random.uniform(ks[4], (), jnp.float32) * 10.0

    cases = [
        (x, t, sigma_sc),                                  # scalar sigma
        (x, t, sigma_feat),                                # per-feature sigma
        (x, t, sigma_el),                                  # per-element sigma
        (x.astype(jnp.bfloat16), t.astype(jnp.bfloat16), sigma_sc),  # bf16 stream
    ]
    for xi, ti, si in cases:
        out = elbo_regression(xi, ti, si, no_dim, kl,
                              train_size=train_size, kl_weight=kl_weight)
        out = jax.block_until_ready(out)
        ref = elbo_regression_ref(xi, ti, si, no_dim, kl,
                                  train_size=train_size, kl_weight=kl_weight)
        rel = abs(float(out) - float(ref)) / max(abs(float(ref)), 1e-6)
        assert rel < 1e-4, f"mismatch: pallas={float(out)} ref={float(ref)} rel={rel}"

    # Tiny input exercises the pure-JAX fast path (kernel launch not worth it).
    xs = jax.random.normal(ks[5], (4, 5), jnp.float32)
    out_small = jax.block_until_ready(
        elbo_regression(xs, xs * 0.9, sigma_sc, no_dim, kl,
                        train_size=train_size, kl_weight=kl_weight))
    ref_small = elbo_regression_ref(xs, xs * 0.9, sigma_sc, no_dim, kl,
                                    train_size=train_size, kl_weight=kl_weight)
    rel_small = abs(float(out_small) - float(ref_small)) / max(
        abs(float(ref_small)), 1e-6)
    assert rel_small < 1e-4, "small-input fast path mismatch"

    print("KERNEL_OK")
</pallas_src>

<mosaic_0001>
module attributes {stable_mosaic.version = 11 : i64} {
  func.func @_accum_wsq(%arg0: i32, %arg1: i32, %arg2: memref<264x130xf32, #tpu.memory_space<vmem>>, %arg3: memref<264x130xf32, #tpu.memory_space<vmem>>, %arg4: memref<1x130xf32, #tpu.memory_space<vmem>>, %arg5: memref<8x130xf32, #tpu.memory_space<vmem>>) attributes {dimension_semantics = [#tpu.dimension_semantics<parallel>, #tpu.dimension_semantics<arbitrary>], iteration_bounds = array<i64: 2, 1>, scalar_prefetch = 0 : i64, scratch_operands = 0 : i64, tpu.core_type = #tpu.core_type<tc>, window_params = [{transform_indices = @transform_0, window_bounds = array<i64: 264, 130>}, {transform_indices = @transform_1, window_bounds = array<i64: 264, 130>}, {pipeline_mode = #tpu.pipeline_mode<synchronous>, transform_indices = @transform_2, window_bounds = array<i64: 1, 130>}, {transform_indices = @transform_3, window_bounds = array<i64: 8, 130>}]} {
    %c1_i32 = arith.constant 1 : i32
    %0 = arith.muli %arg0, %c1_i32 : i32
    %1 = arith.addi %0, %arg1 : i32
    %c264_i32 = arith.constant 264 : i32
    %2 = arith.muli %1, %c264_i32 : i32
    %c0_i32 = arith.constant 0 : i32
    %3 = arith.cmpi eq, %arg1, %c0_i32 : i32
    %4 = arith.extui %3 : i1 to i32
    %c0_i32_0 = arith.constant 0 : i32
    %5 = arith.cmpi ne, %4, %c0_i32_0 : i32
    scf.if %5 {
      %cst = arith.constant 0.000000e+00 : f32
      %15 = vector.broadcast %cst : f32 to vector<8x130xf32>
      %c0_6 = arith.constant 0 : index
      %c0_7 = arith.constant 0 : index
      %16 = vector.load %arg5[%c0_6, %c0_7] : memref<8x130xf32, #tpu.memory_space<vmem>>, vector<8x130xf32>
      tpu.vector_store %arg5[%c0_6, %c0_7], %15 {strides = array<i32>} : memref<8x130xf32, #tpu.memory_space<vmem>>, vector<8x130xf32>,
    } else {
    }
    %c0 = arith.constant 0 : index
    %c0_1 = arith.constant 0 : index
    %6 = vector.load %arg4[%c0, %c0_1] : memref<1x130xf32, #tpu.memory_space<vmem>>, vector<1x130xf32>
    %c1_i32_2 = arith.constant 1 : i32
    %7 = arith.addi %1, %c1_i32_2 : i32
    %c264_i32_3 = arith.constant 264 : i32
    %8 = arith.muli %7, %c264_i32_3 : i32
    %c522_i32 = arith.constant 522 : i32
    %9 = arith.cmpi sle, %8, %c522_i32 : i32
    %10 = arith.extui %9 : i1 to i32
    %c0_i32_4 = arith.constant 0 : i32
    %11 = arith.cmpi ne, %10, %c0_i32_4 : i32
    scf.if %11 {
      %c0_i32_6 = arith.constant 0 : i32
      %c1_i32_7 = arith.constant 1 : i32
      %15 = arith.muli %c0_i32_6, %c1_i32_7 : i32
      %c0_i32_8 = arith.constant 0 : i32
      %16 = arith.addi %c0_i32_8, %15 : i32
      %c264_i32_9 = arith.constant 264 : i32
      %17 = arith.muli %16, %c264_i32_9 : i32
      %18 = tpu.assume_multiple %17, 264 : i32
      %19 = arith.index_cast %18 : i32 to index
      %c0_10 = arith.constant 0 : index
      %20 = vector.load %arg2[%19, %c0_10] : memref<264x130xf32, #tpu.memory_space<vmem>>, vector<264x130xf32>
      %21 = arith.index_cast %18 : i32 to index
      %c0_11 = arith.constant 0 : index
      %22 = vector.load %arg3[%21, %c0_11] : memref<264x130xf32, #tpu.memory_space<vmem>>, vector<264x130xf32>
      %23 = arith.subf %22, %20 : vector<264x130xf32>
      %24 = arith.mulf %23, %23 : vector<264x130xf32>
      %25 = vector.broadcast %6 : vector<1x130xf32> to vector<264x130xf32>
      %26 = arith.mulf %24, %25 : vector<264x130xf32>
      %c0_12 = arith.constant 0 : index
      %c0_13 = arith.constant 0 : index
      %27 = vector.load %arg5[%c0_12, %c0_13] : memref<8x130xf32, #tpu.memory_space<vmem>>, vector<8x130xf32>
      %28 = vector.shape_cast %26 : vector<264x130xf32> to vector<33x8x130xf32>
      %cst = arith.constant dense<0.000000e+00> : vector<8x130xf32>
      %29 = vector.multi_reduction <add>, %28, %cst [0] : vector<33x8x130xf32> to vector<8x130xf32>
      %30 = arith.addf %27, %29 : vector<8x130xf32>
      %c0_14 = arith.constant 0 : index
      %c0_15 = arith.constant 0 : index
      %31 = vector.load %arg5[%c0_14, %c0_15] : memref<8x130xf32, #tpu.memory_space<vmem>>, vector<8x130xf32>
      tpu.vector_store %arg5[%c0_14, %c0_15], %30 {strides = array<i32>} : memref<8x130xf32, #tpu.memory_space<vmem>>, vector<8x130xf32>,
      %c1_i32_16 = arith.constant 1 : i32
    } else {
    }
    %true = arith.constant true
    %12 = arith.xori %9, %true : i1
    %13 = arith.extui %12 : i1 to i32
    %c0_i32_5 = arith.constant 0 : i32
    %14 = arith.cmpi ne, %13, %c0_i32_5 : i32
    scf.if %14 {
      %c0_i32_6 = arith.constant 0 : i32
      %c1_i32_7 = arith.constant 1 : i32
      %15 = arith.muli %c0_i32_6, %c1_i32_7 : i32
      %c0_i32_8 = arith.constant 0 : i32
      %16 = arith.addi %c0_i32_8, %15 : i32
      %c264_i32_9 = arith.constant 264 : i32
      %17 = arith.muli %16, %c264_i32_9 : i32
      %18 = tpu.assume_multiple %17, 264 : i32
      %19 = arith.index_cast %18 : i32 to index
      %c0_10 = arith.constant 0 : index
      %20 = vector.load %arg2[%19, %c0_10] : memref<264x130xf32, #tpu.memory_space<vmem>>, vector<264x130xf32>
      %21 = arith.index_cast %18 : i32 to index
      %c0_11 = arith.constant 0 : index
      %22 = vector.load %arg3[%21, %c0_11] : memref<264x130xf32, #tpu.memory_space<vmem>>, vector<264x130xf32>
      %23 = arith.subf %22, %20 : vector<264x130xf32>
      %24 = arith.addi %2, %18 : i32
      %25 = tpu.iota {dimensions = array<i32: 0>} : vector<264x130xi32>
      %26 = vector.broadcast %24 : i32 to vector<264x130xi32>
      %27 = arith.addi %26, %25 : vector<264x130xi32>
      %c522_i32_12 = arith.constant 522 : i32
      %28 = vector.broadcast %c522_i32_12 : i32 to vector<264x130xi32>
      %29 = arith.cmpi slt, %27, %28 : vector<264x130xi32>
      %cst = arith.constant 0.000000e+00 : f32
      %30 = vector.broadcast %cst : f32 to vector<264x130xf32>
      %31 = arith.select %29, %23, %30 : vector<264x130xi1>, vector<264x130xf32>
      %32 = arith.mulf %31, %31 : vector<264x130xf32>
      %33 = vector.broadcast %6 : vector<1x130xf32> to vector<264x130xf32>
      %34 = arith.mulf %32, %33 : vector<264x130xf32>
      %c0_13 = arith.constant 0 : index
      %c0_14 = arith.constant 0 : index
      %35 = vector.load %arg5[%c0_13, %c0_14] : memref<8x130xf32, #tpu.memory_space<vmem>>, vector<8x130xf32>
      %36 = vector.shape_cast %34 : vector<264x130xf32> to vector<33x8x130xf32>
      %cst_15 = arith.constant dense<0.000000e+00> : vector<8x130xf32>
      %37 = vector.multi_reduction <add>, %36, %cst_15 [0] : vector<33x8x130xf32> to vector<8x130xf32>
      %38 = arith.addf %35, %37 : vector<8x130xf32>
      %c0_16 = arith.constant 0 : index
      %c0_17 = arith.constant 0 : index
      %39 = vector.load %arg5[%c0_16, %c0_17] : memref<8x130xf32, #tpu.memory_space<vmem>>, vector<8x130xf32>
      tpu.vector_store %arg5[%c0_16, %c0_17], %38 {strides = array<i32>} : memref<8x130xf32, #tpu.memory_space<vmem>>, vector<8x130xf32>,
      %c1_i32_18 = arith.constant 1 : i32
    } else {
    }
    return
  }
  func.func @transform_0(%arg0: i32, %arg1: i32) -> (i32, i32) {
    %c1_i32 = arith.constant 1 : i32
    %0 = arith.muli %arg0, %c1_i32 : i32
    %1 = arith.addi %0, %arg1 : i32
    %c1_i32_0 = arith.constant 1 : i32
    %2 = arith.minsi %1, %c1_i32_0 : i32
    %c0_i32 = arith.constant 0 : i32
    %c0_i32_1 = arith.constant 0 : i32
    return %2, %c0_i32 : i32, i32
  }
  func.func @transform_1(%arg0: i32, %arg1: i32) -> (i32, i32) {
    %c1_i32 = arith.constant 1 : i32
    %0 = arith.muli %arg0, %c1_i32 : i32
    %1 = arith.addi %0, %arg1 : i32
    %c1_i32_0 = arith.constant 1 : i32
    %2 = arith.minsi %1, %c1_i32_0 : i32
    %c0_i32 = arith.constant 0 : i32
    %c0_i32_1 = arith.constant 0 : i32
    return %2, %c0_i32 : i32, i32
  }
  func.func @transform_2(%arg0: i32, %arg1: i32) -> (i32, i32) {
    %c0_i32 = arith.constant 0 : i32
    %c0_i32_0 = arith.constant 0 : i32
    %c0_i32_1 = arith.constant 0 : i32
    return %c0_i32, %c0_i32_0 : i32, i32
  }
  func.func @transform_3(%arg0: i32, %arg1: i32) -> (i32, i32) {
    %c0_i32 = arith.constant 0 : i32
    %c0_i32_0 = arith.constant 0 : i32
    return %arg0, %c0_i32 : i32, i32
  }
}

</mosaic_0001>

<llo_original>
// kernel: tpu_custom_call.1
$region0: #{tpu_custom_call.1}
  #allocation0 [shape = 'u32[]', space=smem, size = 0x4, offset = 0x4, fixed_abs, tag = 'smem constant byte address 0x4 - core index']
  #allocation1 [shape = 'u32[144,128]{1,0:T(1,128)}', space=vmem, size = 0x12000, scoped, tag = 'internal scratch']
  %s0 = inlined_call_operand.vmem [shape: f32[522,130], index: 0, kind: input, shape index: {}]
  %s1 = inlined_call_operand.vmem [shape: f32[522,130], index: 1, kind: input, shape index: {}]
  %s2 = inlined_call_operand.vmem [shape: f32[1,130], index: 2, kind: input, shape index: {}]
  %s3 = inlined_call_operand.hbm [shape: f32[16,130], index: 3, kind: output, shape index: {}]
  %s4 = sld [smem:[#allocation0]]
  $region57: #{tpu_custom_call.1} parent=0
    _
  %s6 = ssub.s32 1, %s4
  %s7 = scalar_select 0, %s6, %s4
  $region1: #{tpu_custom_call.1} parent=0
    #allocation2 [shape = 'u8[16384]{0}', space=vmem, size = 0x4000, scoped, tag = 'output window, operand 0']
    #allocation3 [shape = 's32[2]{0}', space=sflag, size = 0x8, scoped, tag = 'scoped memory for tpu_custom_call.1']
    %8 = vsyncpa [#allocation3], 0
    %s9 = scalar_lea.sflag [#allocation3], 1
    %10 = vsyncpa %s9, 0
    loop: start=0, step=1, limit=4
    $region2: #{tpu_custom_call.1} parent=1 // loop_pre_header
      _
    $region3: #{tpu_custom_call.1} parent=1 // loop_header
      %s12 = sphi 0, %s16
      %p13 = scmp.ge.s32.totalorder %s12, 4
      %s19 = sphi 0, %s31
      %s20 = sphi 0, %s27
      %s21 = sphi 0, %s19
      %s22 = sphi 0, %s20
      %s23 = sphi 0, %s21
      %s24 = sphi 0, %s22
      %s40 = sphi 0, %s42
      %s43 = sphi 0, %s40
      %s44 = sphi 0, %s43
      %s60 = sphi 0, %s44
      %s72 = sphi 0, %s74
      %s75 = sphi 0, %s72
      %s76 = sphi 0, %s75
      %s92 = sphi 0, %s76
      %s96 = sphi 0, %s96
      %s98 = sphi 0, %s96
      %s99 = sphi 0, %s98
      %s113 = sphi 0, %s99
      %s119 = sphi 0, %s121
      %s122 = sphi 0, %s119
      %s123 = sphi 0, %s122
      %s139 = sphi 0, %s123
    $region4: #{tpu_custom_call.1} parent=1 // loop_header_branch
      %15 = sbr.rel (%p13) target = $region8
    $region5: #{tpu_custom_call.1} parent=1 // loop_body
      %s17 = ssub.s32 %s12, 1
      %s18 = ssub.s32 %s12, 2
      %s25 = sadd.s32 1, %s20
      %p26 = scmp.ge.s32.totalorder %s25, 1
      %s27 = scalar_select %p26, 0, %s25
      %s28 = sadd.s32 1, %s19
      %s29 = scalar_select %p26, %s28, %s19
      %p30 = scmp.ge.s32.totalorder %s29, 2
      %s31 = scalar_select %p30, 0, %s29
      %s32 = sadd.s32 %s19, %s20
      %p33 = scmp.lt.s32.totalorder %s32, 1
      %s34 = scalar_select %p33, %s32, 1
      %s35 = sadd.s32 %s31, %s27
      %p36 = scmp.lt.s32.totalorder %s35, 1
      %s37 = scalar_select %p36, %s35, 1
      %s38 = ssub.s32 %s34, %s37
      %p39 = scmp.eq.s32.totalorder %s38, 0
      %s41 = sadd.s32 %s40, 1
      %s42 = scalar_select %p39, %s40, %s41
      %p45 = pneg %p39
      %p46 = scmp.eq.s32.totalorder %s12, 1
      %p47 = por %p45, %p46
      %p48 = scmp.ne.s32.totalorder %s40, %s43
      %p49 = scmp.eq.s32.totalorder %s12, 0
      %p50 = por %p48, %p49
      %p51 = scmp.ne.s32.totalorder %s40, %s43
      %p52 = scmp.eq.s32.totalorder %s17, 1
      %p53 = por %p51, %p52
      %p54 = scmp.ne.s32.totalorder %s43, %s44
      %p55 = scmp.eq.s32.totalorder %s17, 0
      %p56 = por %p54, %p55
      %p57 = scmp.ne.s32.totalorder %s43, %s44
      %p58 = scmp.eq.s32.totalorder %s18, 1
      %p59 = por %p57, %p58
      %p61 = scmp.ne.s32.totalorder %s44, %s60
      %p62 = scmp.eq.s32.totalorder %s18, 0
      %p63 = por %p61, %p62
      %s64 = sadd.s32 %s19, %s20
      %p65 = scmp.lt.s32.totalorder %s64, 1
      %s66 = scalar_select %p65, %s64, 1
      %s67 = sadd.s32 %s31, %s27
      %p68 = scmp.lt.s32.totalorder %s67, 1
      %s69 = scalar_select %p68, %s67, 1
      %s70 = ssub.s32 %s66, %s69
      %p71 = scmp.eq.s32.totalorder %s70, 0
      %s73 = sadd.s32 %s72, 1
      %s74 = scalar_select %p71, %s72, %s73
      %p77 = pneg %p71
      %p78 = scmp.eq.s32.totalorder %s12, 1
      %p79 = por %p77, %p78
      %p80 = scmp.ne.s32.totalorder %s72, %s75
      %p81 = scmp.eq.s32.totalorder %s12, 0
      %p82 = por %p80, %p81
      %p83 = scmp.ne.s32.totalorder %s72, %s75
      %p84 = scmp.eq.s32.totalorder %s17, 1
      %p85 = por %p83, %p84
      %p86 = scmp.ne.s32.totalorder %s75, %s76
      %p87 = scmp.eq.s32.totalorder %s17, 0
      %p88 = por %p86, %p87
      %p89 = scmp.ne.s32.totalorder %s75, %s76
      %p90 = scmp.eq.s32.totalorder %s18, 1
      %p91 = por %p89, %p90
      %p93 = scmp.ne.s32.totalorder %s76, %s92
      %p94 = scmp.eq.s32.totalorder %s18, 0
      %p95 = por %p93, %p94
      %s97 = sadd.s32 %s96, 1
      %p100 = scmp.eq.s32.totalorder %s12, 1
      %p101 = scmp.ne.s32.totalorder %s96, %s98
      %p102 = scmp.eq.s32.totalorder %s12, 0
      %p103 = por %p101, %p102
      %p104 = scmp.ne.s32.totalorder %s96, %s98
      %p105 = scmp.eq.s32.totalorder %s17, 1
      %p106 = por %p104, %p105
      %p107 = scmp.ne.s32.totalorder %s98, %s99
      %p108 = scmp.eq.s32.totalorder %s17, 0
      %p109 = por %p107, %p108
      %p110 = scmp.ne.s32.totalorder %s98, %s99
      %p111 = scmp.eq.s32.totalorder %s18, 1
      %p112 = por %p110, %p111
      %p114 = scmp.ne.s32.totalorder %s99, %s113
      %p115 = scmp.eq.s32.totalorder %s18, 0
      %p116 = por %p114, %p115
      %s117 = ssub.s32 %s19, %s31
      %p118 = scmp.eq.s32.totalorder %s117, 0
      %s120 = sadd.s32 %s119, 1
      %s121 = scalar_select %p118, %s119, %s120
      %p124 = pneg %p118
      %p125 = scmp.eq.s32.totalorder %s12, 1
      %p126 = por %p124, %p125
      %p127 = scmp.ne.s32.totalorder %s119, %s122
      %p128 = scmp.eq.s32.totalorder %s12, 0
      %p129 = por %p127, %p128
      %p130 = scmp.ne.s32.totalorder %s119, %s122
      %p131 = scmp.eq.s32.totalorder %s17, 1
      %p132 = por %p130, %p131
      %p133 = scmp.ne.s32.totalorder %s122, %s123
      %p134 = scmp.eq.s32.totalorder %s17, 0
      %p135 = por %p133, %p134
      %p136 = scmp.ne.s32.totalorder %s122, %s123
      %p137 = scmp.eq.s32.totalorder %s18, 1
      %p138 = por %p136, %p137
      %p140 = scmp.ne.s32.totalorder %s123, %s139
      %p141 = scmp.eq.s32.totalorder %s18, 0
      %p142 = por %p140, %p141
      %p143 = scmp.le.s32.totalorder 1, %s12
      %p144 = scmp.lt.s32.totalorder %s12, 3
      %p145 = pnand %p143, %p144
      %p146 = pneg %p145
      // Predicated region
      $region9: #{tpu_custom_call.1} parent=5 // pred_check
        _
      $region10: #{tpu_custom_call.1} parent=5 // pred_check_branch
        %148 = sbr.rel (%p145) target = $region12
      $region11: #{tpu_custom_call.1} parent=5 // pred_region
        %s149 = ssub.s32 %s12, 1
        // Predicated region
        $region13: #{tpu_custom_call.1} parent=11 // pred_check
          %p150 = pneg %p109
        $region14: #{tpu_custom_call.1} parent=11 // pred_check_branch
          %152 = sbr.rel (%p150) target = $region16
        $region15: #{tpu_custom_call.1} parent=11 // pred_region
          _
        $region16: #{tpu_custom_call.1} parent=11 // pred_fallthru
          _
      $region12: #{tpu_custom_call.1} parent=5 // pred_fallthru
        _
      %p153 = scmp.lt.s32.totalorder %s12, 2
      // Predicated region
      $region17: #{tpu_custom_call.1} parent=5 // pred_check
        %p154 = pneg %p153
      $region18: #{tpu_custom_call.1} parent=5 // pred_check_branch
        %156 = sbr.rel (%p154) target = $region20
      $region19: #{tpu_custom_call.1} parent=5 // pred_region
        // Predicated region
        $region21: #{tpu_custom_call.1} parent=19 // pred_check
          %p157 = pneg %p50
        $region22: #{tpu_custom_call.1} parent=19 // pred_check_branch
          %159 = sbr.rel (%p157) target = $region24
        $region23: #{tpu_custom_call.1} parent=19 // pred_region
          %s160 = sadd.s32 %s19, %s20
          %p161 = scmp.lt.s32.totalorder %s160, 1
          %s162 = scalar_select %p161, %s160, 1
          %s163 = smul.u32 33, %s162
          %p164 = scmp.lt.s32.totalorder %s163, 65
          %s165 = scalar_select %p164, %s163, 65
          %s166 = smul.addr %s165, 2
          %s167 = smul.addr %s166, 8
          %s168 = scalar_lea.vmem %s0, %s167
          %s169 = sadd.s32 %s19, %s20
          %p170 = scmp.lt.s32.totalorder %s169, 1
          %s171 = scalar_select %p170, %s169, 1
          %s172 = smul.u32 33, %s171
        $region24: #{tpu_custom_call.1} parent=19 // pred_fallthru
          _
        // Predicated region
        $region25: #{tpu_custom_call.1} parent=19 // pred_check
          %p173 = pneg %p82
        $region26: #{tpu_custom_call.1} parent=19 // pred_check_branch
          %175 = sbr.rel (%p173) target = $region28
        $region27: #{tpu_custom_call.1} parent=19 // pred_region
          %s176 = sadd.s32 %s19, %s20
          %p177 = scmp.lt.s32.totalorder %s176, 1
          %s178 = scalar_select %p177, %s176, 1
          %s179 = smul.u32 33, %s178
          %p180 = scmp.lt.s32.totalorder %s179, 65
          %s181 = scalar_select %p180, %s179, 65
          %s182 = smul.addr %s181, 2
          %s183 = smul.addr %s182, 8
          %s184 = scalar_lea.vmem %s1, %s183
          %s185 = sadd.s32 %s19, %s20
          %p186 = scmp.lt.s32.totalorder %s185, 1
          %s187 = scalar_select %p186, %s185, 1
          %s188 = smul.u32 33, %s187
        $region28: #{tpu_custom_call.1} parent=19 // pred_fallthru
          _
      $region20: #{tpu_custom_call.1} parent=5 // pred_fallthru
        _
      %p189 = scmp.le.s32.totalorder 1, %s12
      %p190 = scmp.lt.s32.totalorder %s12, 3
      %p191 = pnand %p189, %p190
      %p192 = pneg %p191
      // Predicated region
      $region29: #{tpu_custom_call.1} parent=5 // pred_check
        _
      $region30: #{tpu_custom_call.1} parent=5 // pred_check_branch
        %194 = sbr.rel (%p191) target = $region32
      $region31: #{tpu_custom_call.1} parent=5 // pred_region
        %s195 = ssub.s32 %s12, 1
        %s196 = sadd.s32 %s21, %s22
        %p197 = scmp.lt.s32.totalorder %s196, 1
        %s198 = scalar_select %p197, %s196, 1
        %s199 = smul.u32 33, %s198
        %p200 = scmp.lt.s32.totalorder %s199, 65
        %s201 = scalar_select %p200, %s199, 65
        %s202 = smul.addr %s201, 2
        %s203 = smul.addr %s202, 8
        %s204 = scalar_lea.vmem %s0, %s203
        %p205 = pneg %p56
        %p206 = pneg %p53
        %s207 = sadd.s32 %s21, %s22
        %p208 = scmp.lt.s32.totalorder %s207, 1
        %s209 = scalar_select %p208, %s207, 1
        %s210 = smul.u32 33, %s209
        %p211 = scmp.lt.s32.totalorder %s210, 65
        %s212 = scalar_select %p211, %s210, 65
        %s213 = smul.addr %s212, 2
        %s214 = smul.addr %s213, 8
        %s215 = scalar_lea.vmem %s1, %s214
        %p216 = pneg %p88
        %p217 = pneg %p85
        %p218 = pneg %p109
        %p219 = pneg %p106
        %p220 = pneg %p135
        %p221 = pneg %p132
        %s222 = sand.u32 %s122, 1
        %s223 = scalar_lea.sflag [#allocation3], %s222
        %s224 = sand.u32 %s122, 1
        %s225 = smul.addr %s224, 16
        %s226 = scalar_lea.vmem [#allocation2], %s225
        %s227 = sadd.s32 %s21, %s22
        %p228 = scmp.lt.s32.totalorder %s227, 1
        %s229 = scalar_select %p228, %s227, 1
        %s230 = smul.u32 33, %s229
        %p231 = scmp.lt.s32.totalorder %s230, 65
        %s232 = scalar_select %p231, %s230, 65
        %s233 = smul.addr %s232, 2
        %s234 = smul.addr %s233, 8
        %s235 = scalar_lea.vmem %s0, %s234
        %s236 = sadd.s32 %s21, %s22
        %p237 = scmp.lt.s32.totalorder %s236, 1
        %s238 = scalar_select %p237, %s236, 1
        %s239 = smul.u32 33, %s238
        %s240 = sadd.s32 %s21, %s22
        %p241 = scmp.lt.s32.totalorder %s240, 1
        %s242 = scalar_select %p241, %s240, 1
        %s243 = smul.u32 33, %s242
        %p244 = scmp.lt.s32.totalorder %s243, 65
        %s245 = scalar_select %p244, %s243, 65
        %s246 = smul.addr %s245, 2
        %s247 = smul.addr %s246, 8
        %s248 = scalar_lea.vmem %s1, %s247
        %s249 = sadd.s32 %s21, %s22
        %p250 = scmp.lt.s32.totalorder %s249, 1
        %s251 = scalar_select %p250, %s249, 1
        %s252 = smul.u32 33, %s251
        %s253 = sadd.s32 %s21, %s22
        %s254 = smul.u32 %s253, 264
        %p255 = scmp.eq.s32.totalorder %s22, 0
        // Predicated region
        $region33: #{tpu_custom_call.1} parent=31 // pred_check
          %p256 = pneg %p255
        $region34: #{tpu_custom_call.1} parent=31 // pred_check_branch
          %258 = sbr.rel (%p256) target = $region36
        $region35: #{tpu_custom_call.1} parent=31 // pred_region
          %259 = vst [vmem:[%s226] sm:$0xff] 0.0
          %vm260 = vcmask 15360
          %261 = vst.msk [vmem:[%s226 + $0x8] sm:$0xff] %vm260, 0.0
        $region36: #{tpu_custom_call.1} parent=31 // pred_fallthru
          _
        %v262 = vld [vmem:[%s2] sm:$0x3]
        %s263 = sadd.s32 %s253, 1
        %s264 = smul.u32 %s263, 264
        %p265 = scmp.le.s32.totalorder %s264, 522
        // Predicated region
        $region37: #{tpu_custom_call.1} parent=31 // pred_check
          %p266 = pneg %p265
        $region38: #{tpu_custom_call.1} parent=31 // pred_check_branch
          %268 = sbr.rel (%p266) target = $region40
        $region39: #{tpu_custom_call.1} parent=31 // pred_region
          %s269 = smul.u32 0, 2
          %s270 = smul.addr %s269, 8
          %s271 = scalar_lea.vmem %s235, %s270
          %v272 = vld [vmem:[%s271] sm:$0xff]
          %v273 = vld [vmem:[%s271 + $0x8] sm:$0xff]
          %v274 = vld [vmem:[%s271 + $0x10] sm:$0xff]
          %v275 = vld [vmem:[%s271 + $0x18] sm:$0xff]
          %v276 = vld [vmem:[%s271 + $0x20] sm:$0xff]
          %v277 = vld [vmem:[%s271 + $0x28] sm:$0xff]
          %v278 = vld [vmem:[%s271 + $0x30] sm:$0xff]
          %v279 = vld [vmem:[%s271 + $0x38] sm:$0xff]
          %v280 = vld [vmem:[%s271 + $0x40] sm:$0xff]
          %v281 = vld [vmem:[%s271 + $0x48] sm:$0xff]
          %v282 = vld [vmem:[%s271 + $0x50] sm:$0xff]
          %v283 = vld [vmem:[%s271 + $0x58] sm:$0xff]
          %v284 = vld [vmem:[%s271 + $0x60] sm:$0xff]
          %v285 = vld [vmem:[%s271 + $0x68] sm:$0xff]
          %v286 = vld [vmem:[%s271 + $0x70] sm:$0xff]
          %v287 = vld [vmem:[%s271 + $0x78] sm:$0xff]
          %v288 = vld [vmem:[%s271 + $0x80] sm:$0xff]
          %v289 = vld [vmem:[%s271 + $0x88] sm:$0xff]
          %v290 = vld [vmem:[%s271 + $0x90] sm:$0xff]
          %v291 = vld [vmem:[%s271 + $0x98] sm:$0xff]
          %v292 = vld [vmem:[%s271 + $0xa0] sm:$0xff]
          %v293 = vld [vmem:[%s271 + $0xa8] sm:$0xff]
          %v294 = vld [vmem:[%s271 + $0xb0] sm:$0xff]
          %v295 = vld [vmem:[%s271 + $0xb8] sm:$0xff]
          %v296 = vld [vmem:[%s271 + $0xc0] sm:$0xff]
          %v297 = vld [vmem:[%s271 + $0xc8] sm:$0xff]
          %v298 = vld [vmem:[%s271 + $0xd0] sm:$0xff]
          %v299 = vld [vmem:[%s271 + $0xd8] sm:$0xff]
          %v300 = vld [vmem:[%s271 + $0xe0] sm:$0xff]
          %v301 = vld [vmem:[%s271 + $0xe8] sm:$0xff]
          %v302 = vld [vmem:[%s271 + $0xf0] sm:$0xff]
          %v303 = vld [vmem:[%s271 + $0xf8] sm:$0xff]
          %v304 = vld [vmem:[%s271 + $0x100] sm:$0xff]
          %v305 = vld [vmem:[%s271 + $0x108] sm:$0xff]
          %v306 = vld [vmem:[%s271 + $0x110] sm:$0xff]
          %v307 = vld [vmem:[%s271 + $0x118] sm:$0xff]
          %v308 = vld [vmem:[%s271 + $0x120] sm:$0xff]
          %v309 = vld [vmem:[%s271 + $0x128] sm:$0xff]
          %v310 = vld [vmem:[%s271 + $0x130] sm:$0xff]
          %v311 = vld [vmem:[%s271 + $0x138] sm:$0xff]
          %v312 = vld [vmem:[%s271 + $0x140] sm:$0xff]
          %v313 = vld [vmem:[%s271 + $0x148] sm:$0xff]
          %v314 = vld [vmem:[%s271 + $0x150] sm:$0xff]
          %v315 = vld [vmem:[%s271 + $0x158] sm:$0xff]
          %v316 = vld [vmem:[%s271 + $0x160] sm:$0xff]
          %v317 = vld [vmem:[%s271 + $0x168] sm:$0xff]
          %v318 = vld [vmem:[%s271 + $0x170] sm:$0xff]
          %v319 = vld [vmem:[%s271 + $0x178] sm:$0xff]
          %v320 = vld [vmem:[%s271 + $0x180] sm:$0xff]
          %v321 = vld [vmem:[%s271 + $0x188] sm:$0xff]
          %v322 = vld [vmem:[%s271 + $0x190] sm:$0xff]
          %v323 = vld [vmem:[%s271 + $0x198] sm:$0xff]
          %v324 = vld [vmem:[%s271 + $0x1a0] sm:$0xff]
          %v325 = vld [vmem:[%s271 + $0x1a8] sm:$0xff]
          %v326 = vld [vmem:[%s271 + $0x1b0] sm:$0xff]
          %v327 = vld [vmem:[%s271 + $0x1b8] sm:$0xff]
          %v328 = vld [vmem:[%s271 + $0x1c0] sm:$0xff]
          %v329 = vld [vmem:[%s271 + $0x1c8] sm:$0xff]
          %v330 = vld [vmem:[%s271 + $0x1d0] sm:$0xff]
          %v331 = vld [vmem:[%s271 + $0x1d8] sm:$0xff]
          %v332 = vld [vmem:[%s271 + $0x1e0] sm:$0xff]
          %v333 = vld [vmem:[%s271 + $0x1e8] sm:$0xff]
          %v334 = vld [vmem:[%s271 + $0x1f0] sm:$0xff]
          %v335 = vld [vmem:[%s271 + $0x1f8] sm:$0xff]
          %v336 = vld [vmem:[%s271 + $0x200] sm:$0xff]
          %v337 = vld [vmem:[%s271 + $0x208] sm:$0xff]
          %s338 = smul.addr %s269, 8
          %s339 = scalar_lea.vmem %s248, %s338
          %v340 = vld [vmem:[%s339] sm:$0xff]
          %v341 = vld [vmem:[%s339 + $0x8] sm:$0xff]
          %v342 = vld [vmem:[%s339 + $0x10] sm:$0xff]
          %v343 = vld [vmem:[%s339 + $0x18] sm:$0xff]
          %v344 = vld [vmem:[%s339 + $0x20] sm:$0xff]
          %v345 = vld [vmem:[%s339 + $0x28] sm:$0xff]
          %v346 = vld [vmem:[%s339 + $0x30] sm:$0xff]
          %v347 = vld [vmem:[%s339 + $0x38] sm:$0xff]
          %v348 = vld [vmem:[%s339 + $0x40] sm:$0xff]
          %v349 = vld [vmem:[%s339 + $0x48] sm:$0xff]
          %v350 = vld [vmem:[%s339 + $0x50] sm:$0xff]
          %v351 = vld [vmem:[%s339 + $0x58] sm:$0xff]
          %v352 = vld [vmem:[%s339 + $0x60] sm:$0xff]
          %v353 = vld [vmem:[%s339 + $0x68] sm:$0xff]
          %v354 = vld [vmem:[%s339 + $0x70] sm:$0xff]
          %v355 = vld [vmem:[%s339 + $0x78] sm:$0xff]
          %v356 = vld [vmem:[%s339 + $0x80] sm:$0xff]
          %v357 = vld [vmem:[%s339 + $0x88] sm:$0xff]
          %v358 = vld [vmem:[%s339 + $0x90] sm:$0xff]
          %v359 = vld [vmem:[%s339 + $0x98] sm:$0xff]
          %v360 = vld [vmem:[%s339 + $0xa0] sm:$0xff]
          %v361 = vld [vmem:[%s339 + $0xa8] sm:$0xff]
          %v362 = vld [vmem:[%s339 + $0xb0] sm:$0xff]
          %v363 = vld [vmem:[%s339 + $0xb8] sm:$0xff]
          %v364 = vld [vmem:[%s339 + $0xc0] sm:$0xff]
          %v365 = vld [vmem:[%s339 + $0xc8] sm:$0xff]
          %v366 = vld [vmem:[%s339 + $0xd0] sm:$0xff]
          %v367 = vld [vmem:[%s339 + $0xd8] sm:$0xff]
          %v368 = vld [vmem:[%s339 + $0xe0] sm:$0xff]
          %v369 = vld [vmem:[%s339 + $0xe8] sm:$0xff]
          %v370 = vld [vmem:[%s339 + $0xf0] sm:$0xff]
          %v371 = vld [vmem:[%s339 + $0xf8] sm:$0xff]
          %v372 = vld [vmem:[%s339 + $0x100] sm:$0xff]
          %v373 = vld [vmem:[%s339 + $0x108] sm:$0xff]
          %v374 = vld [vmem:[%s339 + $0x110] sm:$0xff]
          %v375 = vld [vmem:[%s339 + $0x118] sm:$0xff]
          %v376 = vld [vmem:[%s339 + $0x120] sm:$0xff]
          %v377 = vld [vmem:[%s339 + $0x128] sm:$0xff]
          %v378 = vld [vmem:[%s339 + $0x130] sm:$0xff]
          %v379 = vld [vmem:[%s339 + $0x138] sm:$0xff]
          %v380 = vld [vmem:[%s339 + $0x140] sm:$0xff]
          %v381 = vld [vmem:[%s339 + $0x148] sm:$0xff]
          %v382 = vld [vmem:[%s339 + $0x150] sm:$0xff]
          %v383 = vld [vmem:[%s339 + $0x158] sm:$0xff]
          %v384 = vld [vmem:[%s339 + $0x160] sm:$0xff]
          %v385 = vld [vmem:[%s339 + $0x168] sm:$0xff]
          %v386 = vld [vmem:[%s339 + $0x170] sm:$0xff]
          %v387 = vld [vmem:[%s339 + $0x178] sm:$0xff]
          %v388 = vld [vmem:[%s339 + $0x180] sm:$0xff]
          %v389 = vld [vmem:[%s339 + $0x188] sm:$0xff]
          %v390 = vld [vmem:[%s339 + $0x190] sm:$0xff]
          %v391 = vld [vmem:[%s339 + $0x198] sm:$0xff]
          %v392 = vld [vmem:[%s339 + $0x1a0] sm:$0xff]
          %v393 = vld [vmem:[%s339 + $0x1a8] sm:$0xff]
          %v394 = vld [vmem:[%s339 + $0x1b0] sm:$0xff]
          %v395 = vld [vmem:[%s339 + $0x1b8] sm:$0xff]
          %v396 = vld [vmem:[%s339 + $0x1c0] sm:$0xff]
          %v397 = vld [vmem:[%s339 + $0x1c8] sm:$0xff]
          %v398 = vld [vmem:[%s339 + $0x1d0] sm:$0xff]
          %v399 = vld [vmem:[%s339 + $0x1d8] sm:$0xff]
          %v400 = vld [vmem:[%s339 + $0x1e0] sm:$0xff]
          %v401 = vld [vmem:[%s339 + $0x1e8] sm:$0xff]
          %v402 = vld [vmem:[%s339 + $0x1f0] sm:$0xff]
          %v403 = vld [vmem:[%s339 + $0x1f8] sm:$0xff]
          %v404 = vld [vmem:[%s339 + $0x200] sm:$0xff]
          %v405 = vld [vmem:[%s339 + $0x208] sm:$0xff]
          %v406 = vsub.f32 %v340, %v272
          %v407 = vsub.f32 %v341, %v273
          %v408 = vsub.f32 %v342, %v274
          %v409 = vsub.f32 %v343, %v275
          %v410 = vsub.f32 %v344, %v276
          %v411 = vsub.f32 %v345, %v277
          %v412 = vsub.f32 %v346, %v278
          %v413 = vsub.f32 %v347, %v279
          %v414 = vsub.f32 %v348, %v280
          %v415 = vsub.f32 %v349, %v281
          %v416 = vsub.f32 %v350, %v282
          %v417 = vsub.f32 %v351, %v283
          %v418 = vsub.f32 %v352, %v284
          %v419 = vsub.f32 %v353, %v285
          %v420 = vsub.f32 %v354, %v286
          %v421 = vsub.f32 %v355, %v287
          %v422 = vsub.f32 %v356, %v288
          %v423 = vsub.f32 %v357, %v289
          %v424 = vsub.f32 %v358, %v290
          %v425 = vsub.f32 %v359, %v291
          %v426 = vsub.f32 %v360, %v292
          %v427 = vsub.f32 %v361, %v293
          %v428 = vsub.f32 %v362, %v294
          %v429 = vsub.f32 %v363, %v295
          %v430 = vsub.f32 %v364, %v296
          %v431 = vsub.f32 %v365, %v297
          %v432 = vsub.f32 %v366, %v298
          %v433 = vsub.f32 %v367, %v299
          %v434 = vsub.f32 %v368, %v300
          %v435 = vsub.f32 %v369, %v301
          %v436 = vsub.f32 %v370, %v302
          %v437 = vsub.f32 %v371, %v303
          %v438 = vsub.f32 %v372, %v304
          %v439 = vsub.f32 %v373, %v305
          %v440 = vsub.f32 %v374, %v306
          %v441 = vsub.f32 %v375, %v307
          %v442 = vsub.f32 %v376, %v308
          %v443 = vsub.f32 %v377, %v309
          %v444 = vsub.f32 %v378, %v310
          %v445 = vsub.f32 %v379, %v311
          %v446 = vsub.f32 %v380, %v312
          %v447 = vsub.f32 %v381, %v313
          %v448 = vsub.f32 %v382, %v314
          %v449 = vsub.f32 %v383, %v315
          %v450 = vsub.f32 %v384, %v316
          %v451 = vsub.f32 %v385, %v317
          %v452 = vsub.f32 %v386, %v318
          %v453 = vsub.f32 %v387, %v319
          %v454 = vsub.f32 %v388, %v320
          %v455 = vsub.f32 %v389, %v321
          %v456 = vsub.f32 %v390, %v322
          %v457 = vsub.f32 %v391, %v323
          %v458 = vsub.f32 %v392, %v324
          %v459 = vsub.f32 %v393, %v325
          %v460 = vsub.f32 %v394, %v326
          %v461 = vsub.f32 %v395, %v327
          %v462 = vsub.f32 %v396, %v328
          %v463 = vsub.f32 %v397, %v329
          %v464 = vsub.f32 %v398, %v330
          %v465 = vsub.f32 %v399, %v331
          %v466 = vsub.f32 %v400, %v332
          %v467 = vsub.f32 %v401, %v333
          %v468 = vsub.f32 %v402, %v334
          %v469 = vsub.f32 %v403, %v335
          %v470 = vsub.f32 %v404, %v336
          %v471 = vsub.f32 %v405, %v337
          %v472 = vmul.f32 %v406, %v406
          %v473 = vmul.f32 %v407, %v407
          %v474 = vmul.f32 %v408, %v408
          %v475 = vmul.f32 %v409, %v409
          %v476 = vmul.f32 %v410, %v410
          %v477 = vmul.f32 %v411, %v411
          %v478 = vmul.f32 %v412, %v412
          %v479 = vmul.f32 %v413, %v413
          %v480 = vmul.f32 %v414, %v414
          %v481 = vmul.f32 %v415, %v415
          %v482 = vmul.f32 %v416, %v416
          %v483 = vmul.f32 %v417, %v417
          %v484 = vmul.f32 %v418, %v418
          %v485 = vmul.f32 %v419, %v419
          %v486 = vmul.f32 %v420, %v420
          %v487 = vmul.f32 %v421, %v421
          %v488 = vmul.f32 %v422, %v422
          %v489 = vmul.f32 %v423, %v423
          %v490 = vmul.f32 %v424, %v424
          %v491 = vmul.f32 %v425, %v425
          %v492 = vmul.f32 %v426, %v426
          %v493 = vmul.f32 %v427, %v427
          %v494 = vmul.f32 %v428, %v428
          %v495 = vmul.f32 %v429, %v429
          %v496 = vmul.f32 %v430, %v430
          %v497 = vmul.f32 %v431, %v431
          %v498 = vmul.f32 %v432, %v432
          %v499 = vmul.f32 %v433, %v433
          %v500 = vmul.f32 %v434, %v434
          %v501 = vmul.f32 %v435, %v435
          %v502 = vmul.f32 %v436, %v436
          %v503 = vmul.f32 %v437, %v437
          %v504 = vmul.f32 %v438, %v438
          %v505 = vmul.f32 %v439, %v439
          %v506 = vmul.f32 %v440, %v440
          %v507 = vmul.f32 %v441, %v441
          %v508 = vmul.f32 %v442, %v442
          %v509 = vmul.f32 %v443, %v443
          %v510 = vmul.f32 %v444, %v444
          %v511 = vmul.f32 %v445, %v445
          %v512 = vmul.f32 %v446, %v446
          %v513 = vmul.f32 %v447, %v447
          %v514 = vmul.f32 %v448, %v448
          %v515 = vmul.f32 %v449, %v449
          %v516 = vmul.f32 %v450, %v450
          %v517 = vmul.f32 %v451, %v451
          %v518 = vmul.f32 %v452, %v452
          %v519 = vmul.f32 %v453, %v453
          %v520 = vmul.f32 %v454, %v454
          %v521 = vmul.f32 %v455, %v455
          %v522 = vmul.f32 %v456, %v456
          %v523 = vmul.f32 %v457, %v457
          %v524 = vmul.f32 %v458, %v458
          %v525 = vmul.f32 %v459, %v459
          %v526 = vmul.f32 %v460, %v460
          %v527 = vmul.f32 %v461, %v461
          %v528 = vmul.f32 %v462, %v462
          %v529 = vmul.f32 %v463, %v463
          %v530 = vmul.f32 %v464, %v464
          %v531 = vmul.f32 %v465, %v465
          %v532 = vmul.f32 %v466, %v466
          %v533 = vmul.f32 %v467, %v467
          %v534 = vmul.f32 %v468, %v468
          %v535 = vmul.f32 %v469, %v469
          %v536 = vmul.f32 %v470, %v470
          %v537 = vmul.f32 %v471, %v471
          %v539 = vlaneseq
          %v540 = vshrl.u32 %v539, 7
          %v541 = vsub.s32 0, %v540
          %v542 = vrot.slane %v262, %v541
          %v543 = vlaneseq
          %v544 = vshrl.u32 %v543, 7
          %v545 = vsub.s32 1, %v544
          %v546 = vrot.slane %v262, %v545
          %v549 = vmul.f32 %v472, %v542
          %v550 = vmul.f32 %v473, %v546
          %v551 = vmul.f32 %v474, %v542
          %v552 = vmul.f32 %v475, %v546
          %v553 = vmul.f32 %v476, %v542
          %v554 = vmul.f32 %v477, %v546
          %v555 = vmul.f32 %v478, %v542
          %v556 = vmul.f32 %v479, %v546
          %v557 = vmul.f32 %v480, %v542
          %v558 = vmul.f32 %v481, %v546
          %v559 = vmul.f32 %v482, %v542
          %v560 = vmul.f32 %v483, %v546
          %v561 = vmul.f32 %v484, %v542
          %v562 = vmul.f32 %v485, %v546
          %v563 = vmul.f32 %v486, %v542
          %v564 = vmul.f32 %v487, %v546
          %v565 = vmul.f32 %v488, %v542
          %v566 = vmul.f32 %v489, %v546
          %v567 = vmul.f32 %v490, %v542
          %v568 = vmul.f32 %v491, %v546
          %v569 = vmul.f32 %v492, %v542
          %v570 = vmul.f32 %v493, %v546
          %v571 = vmul.f32 %v494, %v542
          %v572 = vmul.f32 %v495, %v546
          %v573 = vmul.f32 %v496, %v542
          %v574 = vmul.f32 %v497, %v546
          %v575 = vmul.f32 %v498, %v542
          %v576 = vmul.f32 %v499, %v546
          %v577 = vmul.f32 %v500, %v542
          %v578 = vmul.f32 %v501, %v546
          %v579 = vmul.f32 %v502, %v542
          %v580 = vmul.f32 %v503, %v546
          %v581 = vmul.f32 %v504, %v542
          %v582 = vmul.f32 %v505, %v546
          %v583 = vmul.f32 %v506, %v542
          %v584 = vmul.f32 %v507, %v546
          %v585 = vmul.f32 %v508, %v542
          %v586 = vmul.f32 %v509, %v546
          %v587 = vmul.f32 %v510, %v542
          %v588 = vmul.f32 %v511, %v546
          %v589 = vmul.f32 %v512, %v542
          %v590 = vmul.f32 %v513, %v546
          %v591 = vmul.f32 %v514, %v542
          %v592 = vmul.f32 %v515, %v546
          %v593 = vmul.f32 %v516, %v542
          %v594 = vmul.f32 %v517, %v546
          %v595 = vmul.f32 %v518, %v542
          %v596 = vmul.f32 %v519, %v546
          %v597 = vmul.f32 %v520, %v542
          %v598 = vmul.f32 %v521, %v546
          %v599 = vmul.f32 %v522, %v542
          %v600 = vmul.f32 %v523, %v546
          %v601 = vmul.f32 %v524, %v542
          %v602 = vmul.f32 %v525, %v546
          %v603 = vmul.f32 %v526, %v542
          %v604 = vmul.f32 %v527, %v546
          %v605 = vmul.f32 %v528, %v542
          %v606 = vmul.f32 %v529, %v546
          %v607 = vmul.f32 %v530, %v542
          %v608 = vmul.f32 %v531, %v546
          %v609 = vmul.f32 %v532, %v542
          %v610 = vmul.f32 %v533, %v546
          %v611 = vmul.f32 %v534, %v542
          %v612 = vmul.f32 %v535, %v546
          %v613 = vmul.f32 %v536, %v542
          %v614 = vmul.f32 %v537, %v546
          %v615 = vld [vmem:[%s226] sm:$0xff]
          %v616 = vld [vmem:[%s226 + $0x8] sm:$0xff]
          %v617 = vadd.f32 %v549, %v551
          %v618 = vadd.f32 %v617, %v553
          %v619 = vadd.f32 %v618, %v555
          %v620 = vadd.f32 %v619, %v557
          %v621 = vadd.f32 %v620, %v559
          %v622 = vadd.f32 %v621, %v561
          %v623 = vadd.f32 %v622, %v563
          %v624 = vadd.f32 %v623, %v565
          %v625 = vadd.f32 %v624, %v567
          %v626 = vadd.f32 %v625, %v569
          %v627 = vadd.f32 %v626, %v571
          %v628 = vadd.f32 %v627, %v573
          %v629 = vadd.f32 %v628, %v575
          %v630 = vadd.f32 %v629, %v577
          %v631 = vadd.f32 %v630, %v579
          %v632 = vadd.f32 %v631, %v581
          %v633 = vadd.f32 %v632, %v583
          %v634 = vadd.f32 %v633, %v585
          %v635 = vadd.f32 %v634, %v587
          %v636 = vadd.f32 %v635, %v589
          %v637 = vadd.f32 %v636, %v591
          %v638 = vadd.f32 %v637, %v593
          %v639 = vadd.f32 %v638, %v595
          %v640 = vadd.f32 %v639, %v597
          %v641 = vadd.f32 %v640, %v599
          %v642 = vadd.f32 %v641, %v601
          %v643 = vadd.f32 %v642, %v603
          %v644 = vadd.f32 %v643, %v605
          %v645 = vadd.f32 %v644, %v607
          %v646 = vadd.f32 %v645, %v609
          %v647 = vadd.f32 %v646, %v611
          %v648 = vadd.f32 %v647, %v613
          %vm649 = vcmask 15360
          %v650 = vsel %vm649, %v550, 0.0
          %v651 = vsel %vm649, %v552, 0.0
          %v652 = vadd.f32 %v650, %v651
          %v653 = vsel %vm649, %v554, 0.0
          %v654 = vadd.f32 %v652, %v653
          %v655 = vsel %vm649, %v556, 0.0
          %v656 = vadd.f32 %v654, %v655
          %v657 = vsel %vm649, %v558, 0.0
          %v658 = vadd.f32 %v656, %v657
          %v659 = vsel %vm649, %v560, 0.0
          %v660 = vadd.f32 %v658, %v659
          %v661 = vsel %vm649, %v562, 0.0
          %v662 = vadd.f32 %v660, %v661
          %v663 = vsel %vm649, %v564, 0.0
          %v664 = vadd.f32 %v662, %v663
          %v665 = vsel %vm649, %v566, 0.0
          %v666 = vadd.f32 %v664, %v665
          %v667 = vsel %vm649, %v568, 0.0
          %v668 = vadd.f32 %v666, %v667
          %v669 = vsel %vm649, %v570, 0.0
          %v670 = vadd.f32 %v668, %v669
          %v671 = vsel %vm649, %v572, 0.0
          %v672 = vadd.f32 %v670, %v671
          %v673 = vsel %vm649, %v574, 0.0
          %v674 = vadd.f32 %v672, %v673
          %v675 = vsel %vm649, %v576, 0.0
          %v676 = vadd.f32 %v674, %v675
          %v677 = vsel %vm649, %v578, 0.0
          %v678 = vadd.f32 %v676, %v677
          %v679 = vsel %vm649, %v580, 0.0
          %v680 = vadd.f32 %v678, %v679
          %v681 = vsel %vm649, %v582, 0.0
          %v682 = vadd.f32 %v680, %v681
          %v683 = vsel %vm649, %v584, 0.0
          %v684 = vadd.f32 %v682, %v683
          %v685 = vsel %vm649, %v586, 0.0
          %v686 = vadd.f32 %v684, %v685
          %v687 = vsel %vm649, %v588, 0.0
          %v688 = vadd.f32 %v686, %v687
          %v689 = vsel %vm649, %v590, 0.0
          %v690 = vadd.f32 %v688, %v689
          %v691 = vsel %vm649, %v592, 0.0
          %v692 = vadd.f32 %v690, %v691
          %v693 = vsel %vm649, %v594, 0.0
          %v694 = vadd.f32 %v692, %v693
          %v695 = vsel %vm649, %v596, 0.0
          %v696 = vadd.f32 %v694, %v695
          %v697 = vsel %vm649, %v598, 0.0
          %v698 = vadd.f32 %v696, %v697
          %v699 = vsel %vm649, %v600, 0.0
          %v700 = vadd.f32 %v698, %v699
          %v701 = vsel %vm649, %v602, 0.0
          %v702 = vadd.f32 %v700, %v701
          %v703 = vsel %vm649, %v604, 0.0
          %v704 = vadd.f32 %v702, %v703
          %v705 = vsel %vm649, %v606, 0.0
          %v706 = vadd.f32 %v704, %v705
          %v707 = vsel %vm649, %v608, 0.0
          %v708 = vadd.f32 %v706, %v707
          %v709 = vsel %vm649, %v610, 0.0
          %v710 = vadd.f32 %v708, %v709
          %v711 = vsel %vm649, %v612, 0.0
          %v712 = vadd.f32 %v710, %v711
          %v713 = vsel %vm649, %v614, 0.0
          %v714 = vadd.f32 %v712, %v713
          %v715 = vadd.f32 %v615, %v648
          %v716 = vadd.f32 %v616, %v714
          %717 = vst [vmem:[%s226] sm:$0xff] %v715
          %718 = vst.msk [vmem:[%s226 + $0x8] sm:$0xff] %vm649, %v716
        $region40: #{tpu_custom_call.1} parent=31 // pred_fallthru
          _
        %p719 = scmp.gt.s32.totalorder %s264, 522
        // Predicated region
        $region41: #{tpu_custom_call.1} parent=31 // pred_check
          %p720 = pneg %p719
        $region42: #{tpu_custom_call.1} parent=31 // pred_check_branch
          %722 = sbr.rel (%p720) target = $region44
        $region43: #{tpu_custom_call.1} parent=31 // pred_region
          %s723 = smul.u32 0, 2
          %s724 = smul.addr %s723, 8
          %s725 = scalar_lea.vmem %s235, %s724
          %v726 = vld [vmem:[%s725] sm:$0xff]
          %v727 = vld [vmem:[%s725 + $0x8] sm:$0xff]
          %v728 = vld [vmem:[%s725 + $0x10] sm:$0xff]
          %v729 = vld [vmem:[%s725 + $0x18] sm:$0xff]
          %v730 = vld [vmem:[%s725 + $0x20] sm:$0xff]
          %v731 = vld [vmem:[%s725 + $0x28] sm:$0xff]
          %v732 = vld [vmem:[%s725 + $0x30] sm:$0xff]
          %v733 = vld [vmem:[%s725 + $0x38] sm:$0xff]
          %v734 = vld [vmem:[%s725 + $0x40] sm:$0xff]
          %v735 = vld [vmem:[%s725 + $0x48] sm:$0xff]
          %v736 = vld [vmem:[%s725 + $0x50] sm:$0xff]
          %v737 = vld [vmem:[%s725 + $0x58] sm:$0xff]
          %v738 = vld [vmem:[%s725 + $0x60] sm:$0xff]
          %v739 = vld [vmem:[%s725 + $0x68] sm:$0xff]
          %v740 = vld [vmem:[%s725 + $0x70] sm:$0xff]
          %v741 = vld [vmem:[%s725 + $0x78] sm:$0xff]
          %v742 = vld [vmem:[%s725 + $0x80] sm:$0xff]
          %v743 = vld [vmem:[%s725 + $0x88] sm:$0xff]
          %v744 = vld [vmem:[%s725 + $0x90] sm:$0xff]
          %v745 = vld [vmem:[%s725 + $0x98] sm:$0xff]
          %v746 = vld [vmem:[%s725 + $0xa0] sm:$0xff]
          %v747 = vld [vmem:[%s725 + $0xa8] sm:$0xff]
          %v748 = vld [vmem:[%s725 + $0xb0] sm:$0xff]
          %v749 = vld [vmem:[%s725 + $0xb8] sm:$0xff]
          %v750 = vld [vmem:[%s725 + $0xc0] sm:$0xff]
          %v751 = vld [vmem:[%s725 + $0xc8] sm:$0xff]
          %v752 = vld [vmem:[%s725 + $0xd0] sm:$0xff]
          %v753 = vld [vmem:[%s725 + $0xd8] sm:$0xff]
          %v754 = vld [vmem:[%s725 + $0xe0] sm:$0xff]
          %v755 = vld [vmem:[%s725 + $0xe8] sm:$0xff]
          %v756 = vld [vmem:[%s725 + $0xf0] sm:$0xff]
          %v757 = vld [vmem:[%s725 + $0xf8] sm:$0xff]
          %v758 = vld [vmem:[%s725 + $0x100] sm:$0xff]
          %v759 = vld [vmem:[%s725 + $0x108] sm:$0xff]
          %v760 = vld [vmem:[%s725 + $0x110] sm:$0xff]
          %v761 = vld [vmem:[%s725 + $0x118] sm:$0xff]
          %v762 = vld [vmem:[%s725 + $0x120] sm:$0xff]
          %v763 = vld [vmem:[%s725 + $0x128] sm:$0xff]
          %v764 = vld [vmem:[%s725 + $0x130] sm:$0xff]
          %v765 = vld [vmem:[%s725 + $0x138] sm:$0xff]
          %v766 = vld [vmem:[%s725 + $0x140] sm:$0xff]
          %v767 = vld [vmem:[%s725 + $0x148] sm:$0xff]
          %v768 = vld [vmem:[%s725 + $0x150] sm:$0xff]
          %v769 = vld [vmem:[%s725 + $0x158] sm:$0xff]
          %v770 = vld [vmem:[%s725 + $0x160] sm:$0xff]
          %v771 = vld [vmem:[%s725 + $0x168] sm:$0xff]
          %v772 = vld [vmem:[%s725 + $0x170] sm:$0xff]
          %v773 = vld [vmem:[%s725 + $0x178] sm:$0xff]
          %v774 = vld [vmem:[%s725 + $0x180] sm:$0xff]
          %v775 = vld [vmem:[%s725 + $0x188] sm:$0xff]
          %v776 = vld [vmem:[%s725 + $0x190] sm:$0xff]
          %v777 = vld [vmem:[%s725 + $0x198] sm:$0xff]
          %v778 = vld [vmem:[%s725 + $0x1a0] sm:$0xff]
          %v779 = vld [vmem:[%s725 + $0x1a8] sm:$0xff]
          %v780 = vld [vmem:[%s725 + $0x1b0] sm:$0xff]
          %v781 = vld [vmem:[%s725 + $0x1b8] sm:$0xff]
          %v782 = vld [vmem:[%s725 + $0x1c0] sm:$0xff]
          %v783 = vld [vmem:[%s725 + $0x1c8] sm:$0xff]
          %v784 = vld [vmem:[%s725 + $0x1d0] sm:$0xff]
          %v785 = vld [vmem:[%s725 + $0x1d8] sm:$0xff]
          %v786 = vld [vmem:[%s725 + $0x1e0] sm:$0xff]
          %v787 = vld [vmem:[%s725 + $0x1e8] sm:$0xff]
          %v788 = vld [vmem:[%s725 + $0x1f0] sm:$0xff]
          %v789 = vld [vmem:[%s725 + $0x1f8] sm:$0xff]
          %v790 = vld [vmem:[%s725 + $0x200] sm:$0xff]
          %v791 = vld [vmem:[%s725 + $0x208] sm:$0xff]
          %s792 = smul.addr %s723, 8
          %s793 = scalar_lea.vmem %s248, %s792
          %v794 = vld [vmem:[%s793] sm:$0xff]
          %v795 = vld [vmem:[%s793 + $0x8] sm:$0xff]
          %v796 = vld [vmem:[%s793 + $0x10] sm:$0xff]
          %v797 = vld [vmem:[%s793 + $0x18] sm:$0xff]
          %v798 = vld [vmem:[%s793 + $0x20] sm:$0xff]
          %v799 = vld [vmem:[%s793 + $0x28] sm:$0xff]
          %v800 = vld [vmem:[%s793 + $0x30] sm:$0xff]
          %v801 = vld [vmem:[%s793 + $0x38] sm:$0xff]
          %v802 = vld [vmem:[%s793 + $0x40] sm:$0xff]
          %v803 = vld [vmem:[%s793 + $0x48] sm:$0xff]
          %v804 = vld [vmem:[%s793 + $0x50] sm:$0xff]
          %v805 = vld [vmem:[%s793 + $0x58] sm:$0xff]
          %v806 = vld [vmem:[%s793 + $0x60] sm:$0xff]
          %v807 = vld [vmem:[%s793 + $0x68] sm:$0xff]
          %v808 = vld [vmem:[%s793 + $0x70] sm:$0xff]
          %v809 = vld [vmem:[%s793 + $0x78] sm:$0xff]
          %v810 = vld [vmem:[%s793 + $0x80] sm:$0xff]
          %v811 = vld [vmem:[%s793 + $0x88] sm:$0xff]
          %v812 = vld [vmem:[%s793 + $0x90] sm:$0xff]
          %v813 = vld [vmem:[%s793 + $0x98] sm:$0xff]
          %v814 = vld [vmem:[%s793 + $0xa0] sm:$0xff]
          %v815 = vld [vmem:[%s793 + $0xa8] sm:$0xff]
          %v816 = vld [vmem:[%s793 + $0xb0] sm:$0xff]
          %v817 = vld [vmem:[%s793 + $0xb8] sm:$0xff]
          %v818 = vld [vmem:[%s793 + $0xc0] sm:$0xff]
          %v819 = vld [vmem:[%s793 + $0xc8] sm:$0xff]
          %v820 = vld [vmem:[%s793 + $0xd0] sm:$0xff]
          %v821 = vld [vmem:[%s793 + $0xd8] sm:$0xff]
          %v822 = vld [vmem:[%s793 + $0xe0] sm:$0xff]
          %v823 = vld [vmem:[%s793 + $0xe8] sm:$0xff]
          %v824 = vld [vmem:[%s793 + $0xf0] sm:$0xff]
          %v825 = vld [vmem:[%s793 + $0xf8] sm:$0xff]
          %v826 = vld [vmem:[%s793 + $0x100] sm:$0xff]
          %v827 = vld [vmem:[%s793 + $0x108] sm:$0xff]
          %v828 = vld [vmem:[%s793 + $0x110] sm:$0xff]
          %v829 = vld [vmem:[%s793 + $0x118] sm:$0xff]
          %v830 = vld [vmem:[%s793 + $0x120] sm:$0xff]
          %v831 = vld [vmem:[%s793 + $0x128] sm:$0xff]
          %v832 = vld [vmem:[%s793 + $0x130] sm:$0xff]
          %v833 = vld [vmem:[%s793 + $0x138] sm:$0xff]
          %v834 = vld [vmem:[%s793 + $0x140] sm:$0xff]
          %v835 = vld [vmem:[%s793 + $0x148] sm:$0xff]
          %v836 = vld [vmem:[%s793 + $0x150] sm:$0xff]
          %v837 = vld [vmem:[%s793 + $0x158] sm:$0xff]
          %v838 = vld [vmem:[%s793 + $0x160] sm:$0xff]
          %v839 = vld [vmem:[%s793 + $0x168] sm:$0xff]
          %v840 = vld [vmem:[%s793 + $0x170] sm:$0xff]
          %v841 = vld [vmem:[%s793 + $0x178] sm:$0xff]
          %v842 = vld [vmem:[%s793 + $0x180] sm:$0xff]
          %v843 = vld [vmem:[%s793 + $0x188] sm:$0xff]
          %v844 = vld [vmem:[%s793 + $0x190] sm:$0xff]
          %v845 = vld [vmem:[%s793 + $0x198] sm:$0xff]
          %v846 = vld [vmem:[%s793 + $0x1a0] sm:$0xff]
          %v847 = vld [vmem:[%s793 + $0x1a8] sm:$0xff]
          %v848 = vld [vmem:[%s793 + $0x1b0] sm:$0xff]
          %v849 = vld [vmem:[%s793 + $0x1b8] sm:$0xff]
          %v850 = vld [vmem:[%s793 + $0x1c0] sm:$0xff]
          %v851 = vld [vmem:[%s793 + $0x1c8] sm:$0xff]
          %v852 = vld [vmem:[%s793 + $0x1d0] sm:$0xff]
          %v853 = vld [vmem:[%s793 + $0x1d8] sm:$0xff]
          %v854 = vld [vmem:[%s793 + $0x1e0] sm:$0xff]
          %v855 = vld [vmem:[%s793 + $0x1e8] sm:$0xff]
          %v856 = vld [vmem:[%s793 + $0x1f0] sm:$0xff]
          %v857 = vld [vmem:[%s793 + $0x1f8] sm:$0xff]
          %v858 = vld [vmem:[%s793 + $0x200] sm:$0xff]
          %v859 = vld [vmem:[%s793 + $0x208] sm:$0xff]
          %v860 = vsub.f32 %v794, %v726
          %v861 = vsub.f32 %v795, %v727
          %v862 = vsub.f32 %v796, %v728
          %v863 = vsub.f32 %v797, %v729
          %v864 = vsub.f32 %v798, %v730
          %v865 = vsub.f32 %v799, %v731
          %v866 = vsub.f32 %v800, %v732
          %v867 = vsub.f32 %v801, %v733
          %v868 = vsub.f32 %v802, %v734
          %v869 = vsub.f32 %v803, %v735
          %v870 = vsub.f32 %v804, %v736
          %v871 = vsub.f32 %v805, %v737
          %v872 = vsub.f32 %v806, %v738
          %v873 = vsub.f32 %v807, %v739
          %v874 = vsub.f32 %v808, %v740
          %v875 = vsub.f32 %v809, %v741
          %v876 = vsub.f32 %v810, %v742
          %v877 = vsub.f32 %v811, %v743
          %v878 = vsub.f32 %v812, %v744
          %v879 = vsub.f32 %v813, %v745
          %v880 = vsub.f32 %v814, %v746
          %v881 = vsub.f32 %v815, %v747
          %v882 = vsub.f32 %v816, %v748
          %v883 = vsub.f32 %v817, %v749
          %v884 = vsub.f32 %v818, %v750
          %v885 = vsub.f32 %v819, %v751
          %v886 = vsub.f32 %v820, %v752
          %v887 = vsub.f32 %v821, %v753
          %v888 = vsub.f32 %v822, %v754
          %v889 = vsub.f32 %v823, %v755
          %v890 = vsub.f32 %v824, %v756
          %v891 = vsub.f32 %v825, %v757
          %v892 = vsub.f32 %v826, %v758
          %v893 = vsub.f32 %v827, %v759
          %v894 = vsub.f32 %v828, %v760
          %v895 = vsub.f32 %v829, %v761
          %v896 = vsub.f32 %v830, %v762
          %v897 = vsub.f32 %v831, %v763
          %v898 = vsub.f32 %v832, %v764
          %v899 = vsub.f32 %v833, %v765
          %v900 = vsub.f32 %v834, %v766
          %v901 = vsub.f32 %v835, %v767
          %v902 = vsub.f32 %v836, %v768
          %v903 = vsub.f32 %v837, %v769
          %v904 = vsub.f32 %v838, %v770
          %v905 = vsub.f32 %v839, %v771
          %v906 = vsub.f32 %v840, %v772
          %v907 = vsub.f32 %v841, %v773
          %v908 = vsub.f32 %v842, %v774
          %v909 = vsub.f32 %v843, %v775
          %v910 = vsub.f32 %v844, %v776
          %v911 = vsub.f32 %v845, %v777
          %v912 = vsub.f32 %v846, %v778
          %v913 = vsub.f32 %v847, %v779
          %v914 = vsub.f32 %v848, %v780
          %v915 = vsub.f32 %v849, %v781
          %v916 = vsub.f32 %v850, %v782
          %v917 = vsub.f32 %v851, %v783
          %v918 = vsub.f32 %v852, %v784
          %v919 = vsub.f32 %v853, %v785
          %v920 = vsub.f32 %v854, %v786
          %v921 = vsub.f32 %v855, %v787
          %v922 = vsub.f32 %v856, %v788
          %v923 = vsub.f32 %v857, %v789
          %v924 = vsub.f32 %v858, %v790
          %v925 = vsub.f32 %v859, %v791
          %s926 = sadd.s32 %s254, 0
          %v927 = vlaneseq
          %v928 = vshrl.u32 %v927, 7
          %v929 = vadd.s32 %v928, 8
          %v930 = vadd.s32 %v928, 16
          %v931 = vadd.s32 %v928, 24
          %v932 = vadd.s32 %v928, 32
          %v933 = vadd.s32 %v928, 40
          %v934 = vadd.s32 %v928, 48
          %v935 = vadd.s32 %v928, 56
          %v936 = vadd.s32 %v928, 64
          %v937 = vadd.s32 %v928, 72
          %v938 = vadd.s32 %v928, 80
          %v939 = vadd.s32 %v928, 88
          %v940 = vadd.s32 %v928, 96
          %v941 = vadd.s32 %v928, 104
          %v942 = vadd.s32 %v928, 112
          %v943 = vadd.s32 %v928, 120
          %v944 = vadd.s32 %v928, 128
          %v945 = vadd.s32 %v928, 136
          %v946 = vadd.s32 %v928, 144
          %v947 = vadd.s32 %v928, 152
          %v948 = vadd.s32 %v928, 160
          %v949 = vadd.s32 %v928, 168
          %v950 = vadd.s32 %v928, 176
          %v951 = vadd.s32 %v928, 184
          %v952 = vadd.s32 %v928, 192
          %v953 = vadd.s32 %v928, 200
          %v954 = vadd.s32 %v928, 208
          %v955 = vadd.s32 %v928, 216
          %v956 = vadd.s32 %v928, 224
          %v957 = vadd.s32 %v928, 232
          %v958 = vadd.s32 %v928, 240
          %v959 = vadd.s32 %v928, 248
          %v960 = vadd.s32 %v928, 256
          %v961 = vstv %s926
          %v962 = vadd.s32 %v961, %v928
          %v963 = vadd.s32 %v961, %v929
          %v964 = vadd.s32 %v961, %v930
          %v965 = vadd.s32 %v961, %v931
          %v966 = vadd.s32 %v961, %v932
          %v967 = vadd.s32 %v961, %v933
          %v968 = vadd.s32 %v961, %v934
          %v969 = vadd.s32 %v961, %v935
          %v970 = vadd.s32 %v961, %v936
          %v971 = vadd.s32 %v961, %v937
          %v972 = vadd.s32 %v961, %v938
          %v973 = vadd.s32 %v961, %v939
          %v974 = vadd.s32 %v961, %v940
          %v975 = vadd.s32 %v961, %v941
          %v976 = vadd.s32 %v961, %v942
          %v977 = vadd.s32 %v961, %v943
          %v978 = vadd.s32 %v961, %v944
          %v979 = vadd.s32 %v961, %v945
          %v980 = vadd.s32 %v961, %v946
          %v981 = vadd.s32 %v961, %v947
          %v982 = vadd.s32 %v961, %v948
          %v983 = vadd.s32 %v961, %v949
          %v984 = vadd.s32 %v961, %v950
          %v985 = vadd.s32 %v961, %v951
          %v986 = vadd.s32 %v961, %v952
          %v987 = vadd.s32 %v961, %v953
          %v988 = vadd.s32 %v961, %v954
          %v989 = vadd.s32 %v961, %v955
          %v990 = vadd.s32 %v961, %v956
          %v991 = vadd.s32 %v961, %v957
          %v992 = vadd.s32 %v961, %v958
          %v993 = vadd.s32 %v961, %v959
          %v994 = vadd.s32 %v961, %v960
          %vm995 = vcmp.lt.s32.totalorder %v962, 522
          %vm996 = vcmp.lt.s32.totalorder %v963, 522
          %vm997 = vcmp.lt.s32.totalorder %v964, 522
          %vm998 = vcmp.lt.s32.totalorder %v965, 522
          %vm999 = vcmp.lt.s32.totalorder %v966, 522
          %vm1000 = vcmp.lt.s32.totalorder %v967, 522
          %vm1001 = vcmp.lt.s32.totalorder %v968, 522
          %vm1002 = vcmp.lt.s32.totalorder %v969, 522
          %vm1003 = vcmp.lt.s32.totalorder %v970, 522
          %vm1004 = vcmp.lt.s32.totalorder %v971, 522
          %vm1005 = vcmp.lt.s32.totalorder %v972, 522
          %vm1006 = vcmp.lt.s32.totalorder %v973, 522
          %vm1007 = vcmp.lt.s32.totalorder %v974, 522
          %vm1008 = vcmp.lt.s32.totalorder %v975, 522
          %vm1009 = vcmp.lt.s32.totalorder %v976, 522
          %vm1010 = vcmp.lt.s32.totalorder %v977, 522
          %vm1011 = vcmp.lt.s32.totalorder %v978, 522
          %vm1012 = vcmp.lt.s32.totalorder %v979, 522
          %vm1013 = vcmp.lt.s32.totalorder %v980, 522
          %vm1014 = vcmp.lt.s32.totalorder %v981, 522
          %vm1015 = vcmp.lt.s32.totalorder %v982, 522
          %vm1016 = vcmp.lt.s32.totalorder %v983, 522
          %vm1017 = vcmp.lt.s32.totalorder %v984, 522
          %vm1018 = vcmp.lt.s32.totalorder %v985, 522
          %vm1019 = vcmp.lt.s32.totalorder %v986, 522
          %vm1020 = vcmp.lt.s32.totalorder %v987, 522
          %vm1021 = vcmp.lt.s32.totalorder %v988, 522
          %vm1022 = vcmp.lt.s32.totalorder %v989, 522
          %vm1023 = vcmp.lt.s32.totalorder %v990, 522
          %vm1024 = vcmp.lt.s32.totalorder %v991, 522
          %vm1025 = vcmp.lt.s32.totalorder %v992, 522
          %vm1026 = vcmp.lt.s32.totalorder %v993, 522
          %vm1027 = vcmp.lt.s32.totalorder %v994, 522
          %v1028 = vsel %vm995, %v860, 0.0
          %v1029 = vsel %vm995, %v861, 0.0
          %v1030 = vsel %vm996, %v862, 0.0
          %v1031 = vsel %vm996, %v863, 0.0
          %v1032 = vsel %vm997, %v864, 0.0
          %v1033 = vsel %vm997, %v865, 0.0
          %v1034 = vsel %vm998, %v866, 0.0
          %v1035 = vsel %vm998, %v867, 0.0
          %v1036 = vsel %vm999, %v868, 0.0
          %v1037 = vsel %vm999, %v869, 0.0
          %v1038 = vsel %vm1000, %v870, 0.0
          %v1039 = vsel %vm1000, %v871, 0.0
          %v1040 = vsel %vm1001, %v872, 0.0
          %v1041 = vsel %vm1001, %v873, 0.0
          %v1042 = vsel %vm1002, %v874, 0.0
          %v1043 = vsel %vm1002, %v875, 0.0
          %v1044 = vsel %vm1003, %v876, 0.0
          %v1045 = vsel %vm1003, %v877, 0.0
          %v1046 = vsel %vm1004, %v878, 0.0
          %v1047 = vsel %vm1004, %v879, 0.0
          %v1048 = vsel %vm1005, %v880, 0.0
          %v1049 = vsel %vm1005, %v881, 0.0
          %v1050 = vsel %vm1006, %v882, 0.0
          %v1051 = vsel %vm1006, %v883, 0.0
          %v1052 = vsel %vm1007, %v884, 0.0
          %v1053 = vsel %vm1007, %v885, 0.0
          %v1054 = vsel %vm1008, %v886, 0.0
          %v1055 = vsel %vm1008, %v887, 0.0
          %v1056 = vsel %vm1009, %v888, 0.0
          %v1057 = vsel %vm1009, %v889, 0.0
          %v1058 = vsel %vm1010, %v890, 0.0
          %v1059 = vsel %vm1010, %v891, 0.0
          %v1060 = vsel %vm1011, %v892, 0.0
          %v1061 = vsel %vm1011, %v893, 0.0
          %v1062 = vsel %vm1012, %v894, 0.0
          %v1063 = vsel %vm1012, %v895, 0.0
          %v1064 = vsel %vm1013, %v896, 0.0
          %v1065 = vsel %vm1013, %v897, 0.0
          %v1066 = vsel %vm1014, %v898, 0.0
          %v1067 = vsel %vm1014, %v899, 0.0
          %v1068 = vsel %vm1015, %v900, 0.0
          %v1069 = vsel %vm1015, %v901, 0.0
          %v1070 = vsel %vm1016, %v902, 0.0
          %v1071 = vsel %vm1016, %v903, 0.0
          %v1072 = vsel %vm1017, %v904, 0.0
          %v1073 = vsel %vm1017, %v905, 0.0
          %v1074 = vsel %vm1018, %v906, 0.0
          %v1075 = vsel %vm1018, %v907, 0.0
          %v1076 = vsel %vm1019, %v908, 0.0
          %v1077 = vsel %vm1019, %v909, 0.0
          %v1078 = vsel %vm1020, %v910, 0.0
          %v1079 = vsel %vm1020, %v911, 0.0
          %v1080 = vsel %vm1021, %v912, 0.0
          %v1081 = vsel %vm1021, %v913, 0.0
          %v1082 = vsel %vm1022, %v914, 0.0
          %v1083 = vsel %vm1022, %v915, 0.0
          %v1084 = vsel %vm1023, %v916, 0.0
          %v1085 = vsel %vm1023, %v917, 0.0
          %v1086 = vsel %vm1024, %v918, 0.0
          %v1087 = vsel %vm1024, %v919, 0.0
          %v1088 = vsel %vm1025, %v920, 0.0
          %v1089 = vsel %vm1025, %v921, 0.0
          %v1090 = vsel %vm1026, %v922, 0.0
          %v1091 = vsel %vm1026, %v923, 0.0
          %v1092 = vsel %vm1027, %v924, 0.0
          %v1093 = vsel %vm1027, %v925, 0.0
          %v1094 = vmul.f32 %v1028, %v1028
          %v1095 = vmul.f32 %v1029, %v1029
          %v1096 = vmul.f32 %v1030, %v1030
          %v1097 = vmul.f32 %v1031, %v1031
          %v1098 = vmul.f32 %v1032, %v1032
          %v1099 = vmul.f32 %v1033, %v1033
          %v1100 = vmul.f32 %v1034, %v1034
          %v1101 = vmul.f32 %v1035, %v1035
          %v1102 = vmul.f32 %v1036, %v1036
          %v1103 = vmul.f32 %v1037, %v1037
          %v1104 = vmul.f32 %v1038, %v1038
          %v1105 = vmul.f32 %v1039, %v1039
          %v1106 = vmul.f32 %v1040, %v1040
          %v1107 = vmul.f32 %v1041, %v1041
          %v1108 = vmul.f32 %v1042, %v1042
          %v1109 = vmul.f32 %v1043, %v1043
          %v1110 = vmul.f32 %v1044, %v1044
          %v1111 = vmul.f32 %v1045, %v1045
          %v1112 = vmul.f32 %v1046, %v1046
          %v1113 = vmul.f32 %v1047, %v1047
          %v1114 = vmul.f32 %v1048, %v1048
          %v1115 = vmul.f32 %v1049, %v1049
          %v1116 = vmul.f32 %v1050, %v1050
          %v1117 = vmul.f32 %v1051, %v1051
          %v1118 = vmul.f32 %v1052, %v1052
          %v1119 = vmul.f32 %v1053, %v1053
          %v1120 = vmul.f32 %v1054, %v1054
          %v1121 = vmul.f32 %v1055, %v1055
          %v1122 = vmul.f32 %v1056, %v1056
          %v1123 = vmul.f32 %v1057, %v1057
          %v1124 = vmul.f32 %v1058, %v1058
          %v1125 = vmul.f32 %v1059, %v1059
          %v1126 = vmul.f32 %v1060, %v1060
          %v1127 = vmul.f32 %v1061, %v1061
          %v1128 = vmul.f32 %v1062, %v1062
          %v1129 = vmul.f32 %v1063, %v1063
          %v1130 = vmul.f32 %v1064, %v1064
          %v1131 = vmul.f32 %v1065, %v1065
          %v1132 = vmul.f32 %v1066, %v1066
          %v1133 = vmul.f32 %v1067, %v1067
          %v1134 = vmul.f32 %v1068, %v1068
          %v1135 = vmul.f32 %v1069, %v1069
          %v1136 = vmul.f32 %v1070, %v1070
          %v1137 = vmul.f32 %v1071, %v1071
          %v1138 = vmul.f32 %v1072, %v1072
          %v1139 = vmul.f32 %v1073, %v1073
          %v1140 = vmul.f32 %v1074, %v1074
          %v1141 = vmul.f32 %v1075, %v1075
          %v1142 = vmul.f32 %v1076, %v1076
          %v1143 = vmul.f32 %v1077, %v1077
          %v1144 = vmul.f32 %v1078, %v1078
          %v1145 = vmul.f32 %v1079, %v1079
          %v1146 = vmul.f32 %v1080, %v1080
          %v1147 = vmul.f32 %v1081, %v1081
          %v1148 = vmul.f32 %v1082, %v1082
          %v1149 = vmul.f32 %v1083, %v1083
          %v1150 = vmul.f32 %v1084, %v1084
          %v1151 = vmul.f32 %v1085, %v1085
          %v1152 = vmul.f32 %v1086, %v1086
          %v1153 = vmul.f32 %v1087, %v1087
          %v1154 = vmul.f32 %v1088, %v1088
          %v1155 = vmul.f32 %v1089, %v1089
          %v1156 = vmul.f32 %v1090, %v1090
          %v1157 = vmul.f32 %v1091, %v1091
          %v1158 = vmul.f32 %v1092, %v1092
          %v1159 = vmul.f32 %v1093, %v1093
          %v1161 = vlaneseq
          %v1162 = vshrl.u32 %v1161, 7
          %v1163 = vsub.s32 0, %v1162
          %v1164 = vrot.slane %v262, %v1163
          %v1165 = vlaneseq
          %v1166 = vshrl.u32 %v1165, 7
          %v1167 = vsub.s32 1, %v1166
          %v1168 = vrot.slane %v262, %v1167
          %v1171 = vmul.f32 %v1094, %v1164
          %v1172 = vmul.f32 %v1095, %v1168
          %v1173 = vmul.f32 %v1096, %v1164
          %v1174 = vmul.f32 %v1097, %v1168
          %v1175 = vmul.f32 %v1098, %v1164
          %v1176 = vmul.f32 %v1099, %v1168
          %v1177 = vmul.f32 %v1100, %v1164
          %v1178 = vmul.f32 %v1101, %v1168
          %v1179 = vmul.f32 %v1102, %v1164
          %v1180 = vmul.f32 %v1103, %v1168
          %v1181 = vmul.f32 %v1104, %v1164
          %v1182 = vmul.f32 %v1105, %v1168
          %v1183 = vmul.f32 %v1106, %v1164
          %v1184 = vmul.f32 %v1107, %v1168
          %v1185 = vmul.f32 %v1108, %v1164
          %v1186 = vmul.f32 %v1109, %v1168
          %v1187 = vmul.f32 %v1110, %v1164
          %v1188 = vmul.f32 %v1111, %v1168
          %v1189 = vmul.f32 %v1112, %v1164
          %v1190 = vmul.f32 %v1113, %v1168
          %v1191 = vmul.f32 %v1114, %v1164
          %v1192 = vmul.f32 %v1115, %v1168
          %v1193 = vmul.f32 %v1116, %v1164
          %v1194 = vmul.f32 %v1117, %v1168
          %v1195 = vmul.f32 %v1118, %v1164
          %v1196 = vmul.f32 %v1119, %v1168
          %v1197 = vmul.f32 %v1120, %v1164
          %v1198 = vmul.f32 %v1121, %v1168
          %v1199 = vmul.f32 %v1122, %v1164
          %v1200 = vmul.f32 %v1123, %v1168
          %v1201 = vmul.f32 %v1124, %v1164
          %v1202 = vmul.f32 %v1125, %v1168
          %v1203 = vmul.f32 %v1126, %v1164
          %v1204 = vmul.f32 %v1127, %v1168
          %v1205 = vmul.f32 %v1128, %v1164
          %v1206 = vmul.f32 %v1129, %v1168
          %v1207 = vmul.f32 %v1130, %v1164
          %v1208 = vmul.f32 %v1131, %v1168
          %v1209 = vmul.f32 %v1132, %v1164
          %v1210 = vmul.f32 %v1133, %v1168
          %v1211 = vmul.f32 %v1134, %v1164
          %v1212 = vmul.f32 %v1135, %v1168
          %v1213 = vmul.f32 %v1136, %v1164
          %v1214 = vmul.f32 %v1137, %v1168
          %v1215 = vmul.f32 %v1138, %v1164
          %v1216 = vmul.f32 %v1139, %v1168
          %v1217 = vmul.f32 %v1140, %v1164
          %v1218 = vmul.f32 %v1141, %v1168
          %v1219 = vmul.f32 %v1142, %v1164
          %v1220 = vmul.f32 %v1143, %v1168
          %v1221 = vmul.f32 %v1144, %v1164
          %v1222 = vmul.f32 %v1145, %v1168
          %v1223 = vmul.f32 %v1146, %v1164
          %v1224 = vmul.f32 %v1147, %v1168
          %v1225 = vmul.f32 %v1148, %v1164
          %v1226 = vmul.f32 %v1149, %v1168
          %v1227 = vmul.f32 %v1150, %v1164
          %v1228 = vmul.f32 %v1151, %v1168
          %v1229 = vmul.f32 %v1152, %v1164
          %v1230 = vmul.f32 %v1153, %v1168
          %v1231 = vmul.f32 %v1154, %v1164
          %v1232 = vmul.f32 %v1155, %v1168
          %v1233 = vmul.f32 %v1156, %v1164
          %v1234 = vmul.f32 %v1157, %v1168
          %v1235 = vmul.f32 %v1158, %v1164
          %v1236 = vmul.f32 %v1159, %v1168
          %v1237 = vld [vmem:[%s226] sm:$0xff]
          %v1238 = vld [vmem:[%s226 + $0x8] sm:$0xff]
          %v1239 = vadd.f32 %v1171, %v1173
          %v1240 = vadd.f32 %v1239, %v1175
          %v1241 = vadd.f32 %v1240, %v1177
          %v1242 = vadd.f32 %v1241, %v1179
          %v1243 = vadd.f32 %v1242, %v1181
          %v1244 = vadd.f32 %v1243, %v1183
          %v1245 = vadd.f32 %v1244, %v1185
          %v1246 = vadd.f32 %v1245, %v1187
          %v1247 = vadd.f32 %v1246, %v1189
          %v1248 = vadd.f32 %v1247, %v1191
          %v1249 = vadd.f32 %v1248, %v1193
          %v1250 = vadd.f32 %v1249, %v1195
          %v1251 = vadd.f32 %v1250, %v1197
          %v1252 = vadd.f32 %v1251, %v1199
          %v1253 = vadd.f32 %v1252, %v1201
          %v1254 = vadd.f32 %v1253, %v1203
          %v1255 = vadd.f32 %v1254, %v1205
          %v1256 = vadd.f32 %v1255, %v1207
          %v1257 = vadd.f32 %v1256, %v1209
          %v1258 = vadd.f32 %v1257, %v1211
          %v1259 = vadd.f32 %v1258, %v1213
          %v1260 = vadd.f32 %v1259, %v1215
          %v1261 = vadd.f32 %v1260, %v1217
          %v1262 = vadd.f32 %v1261, %v1219
          %v1263 = vadd.f32 %v1262, %v1221
          %v1264 = vadd.f32 %v1263, %v1223
          %v1265 = vadd.f32 %v1264, %v1225
          %v1266 = vadd.f32 %v1265, %v1227
          %v1267 = vadd.f32 %v1266, %v1229
          %v1268 = vadd.f32 %v1267, %v1231
          %v1269 = vadd.f32 %v1268, %v1233
          %v1270 = vadd.f32 %v1269, %v1235
          %vm1271 = vcmask 15360
          %v1272 = vsel %vm1271, %v1172, 0.0
          %v1273 = vsel %vm1271, %v1174, 0.0
          %v1274 = vadd.f32 %v1272, %v1273
          %v1275 = vsel %vm1271, %v1176, 0.0
          %v1276 = vadd.f32 %v1274, %v1275
          %v1277 = vsel %vm1271, %v1178, 0.0
          %v1278 = vadd.f32 %v1276, %v1277
          %v1279 = vsel %vm1271, %v1180, 0.0
          %v1280 = vadd.f32 %v1278, %v1279
          %v1281 = vsel %vm1271, %v1182, 0.0
          %v1282 = vadd.f32 %v1280, %v1281
          %v1283 = vsel %vm1271, %v1184, 0.0
          %v1284 = vadd.f32 %v1282, %v1283
          %v1285 = vsel %vm1271, %v1186, 0.0
          %v1286 = vadd.f32 %v1284, %v1285
          %v1287 = vsel %vm1271, %v1188, 0.0
          %v1288 = vadd.f32 %v1286, %v1287
          %v1289 = vsel %vm1271, %v1190, 0.0
          %v1290 = vadd.f32 %v1288, %v1289
          %v1291 = vsel %vm1271, %v1192, 0.0
          %v1292 = vadd.f32 %v1290, %v1291
          %v1293 = vsel %vm1271, %v1194, 0.0
          %v1294 = vadd.f32 %v1292, %v1293
          %v1295 = vsel %vm1271, %v1196, 0.0
          %v1296 = vadd.f32 %v1294, %v1295
          %v1297 = vsel %vm1271, %v1198, 0.0
          %v1298 = vadd.f32 %v1296, %v1297
          %v1299 = vsel %vm1271, %v1200, 0.0
          %v1300 = vadd.f32 %v1298, %v1299
          %v1301 = vsel %vm1271, %v1202, 0.0
          %v1302 = vadd.f32 %v1300, %v1301
          %v1303 = vsel %vm1271, %v1204, 0.0
          %v1304 = vadd.f32 %v1302, %v1303
          %v1305 = vsel %vm1271, %v1206, 0.0
          %v1306 = vadd.f32 %v1304, %v1305
          %v1307 = vsel %vm1271, %v1208, 0.0
          %v1308 = vadd.f32 %v1306, %v1307
          %v1309 = vsel %vm1271, %v1210, 0.0
          %v1310 = vadd.f32 %v1308, %v1309
          %v1311 = vsel %vm1271, %v1212, 0.0
          %v1312 = vadd.f32 %v1310, %v1311
          %v1313 = vsel %vm1271, %v1214, 0.0
          %v1314 = vadd.f32 %v1312, %v1313
          %v1315 = vsel %vm1271, %v1216, 0.0
          %v1316 = vadd.f32 %v1314, %v1315
          %v1317 = vsel %vm1271, %v1218, 0.0
          %v1318 = vadd.f32 %v1316, %v1317
          %v1319 = vsel %vm1271, %v1220, 0.0
          %v1320 = vadd.f32 %v1318, %v1319
          %v1321 = vsel %vm1271, %v1222, 0.0
          %v1322 = vadd.f32 %v1320, %v1321
          %v1323 = vsel %vm1271, %v1224, 0.0
          %v1324 = vadd.f32 %v1322, %v1323
          %v1325 = vsel %vm1271, %v1226, 0.0
          %v1326 = vadd.f32 %v1324, %v1325
          %v1327 = vsel %vm1271, %v1228, 0.0
          %v1328 = vadd.f32 %v1326, %v1327
          %v1329 = vsel %vm1271, %v1230, 0.0
          %v1330 = vadd.f32 %v1328, %v1329
          %v1331 = vsel %vm1271, %v1232, 0.0
          %v1332 = vadd.f32 %v1330, %v1331
          %v1333 = vsel %vm1271, %v1234, 0.0
          %v1334 = vadd.f32 %v1332, %v1333
          %v1335 = vsel %vm1271, %v1236, 0.0
          %v1336 = vadd.f32 %v1334, %v1335
          %v1337 = vadd.f32 %v1237, %v1270
          %v1338 = vadd.f32 %v1238, %v1336
          %1339 = vst [vmem:[%s226] sm:$0xff] %v1337
          %1340 = vst.msk [vmem:[%s226 + $0x8] sm:$0xff] %vm1271, %v1338
        $region44: #{tpu_custom_call.1} parent=31 // pred_fallthru
          _
        %s1341 = sand.u32 %s122, 1
        %s1342 = scalar_lea.sflag [#allocation3], %s1341
        %s1343 = sand.u32 %s122, 1
        %s1344 = smul.addr %s1343, 16
        %s1345 = scalar_lea.vmem [#allocation2], %s1344
        // Predicated region
        $region45: #{tpu_custom_call.1} parent=31 // pred_check
          %p1346 = pneg %p132
        $region46: #{tpu_custom_call.1} parent=31 // pred_check_branch
          %1348 = sbr.rel (%p1346) target = $region48
        $region47: #{tpu_custom_call.1} parent=31 // pred_region
          %s1350 = ssub.s32 256, 256
          %1351 = vsyncadd %s1342, %s1350
          %s1352 = smul.addr %s21, 2
          %s1353 = smul.addr %s1352, 128
          %s1354 = scalar_lea.hbm %s3, %s1353
          %s1356 = sshll.u32 %s1345, 4
          %s1357 = int_to_ptr.vmem [resolvable:$true] %s1356
          %1359 = dma.vmem_to_hbm [thread:$0]  %s1357, 256, %s1354, %s1342
        $region48: #{tpu_custom_call.1} parent=31 // pred_fallthru
          _
      $region32: #{tpu_custom_call.1} parent=5 // pred_fallthru
        _
      %p1360 = scmp.le.s32.totalorder 2, %s12
      // Predicated region
      $region49: #{tpu_custom_call.1} parent=5 // pred_check
        %p1361 = pneg %p1360
      $region50: #{tpu_custom_call.1} parent=5 // pred_check_branch
        %1363 = sbr.rel (%p1361) target = $region52
      $region51: #{tpu_custom_call.1} parent=5 // pred_region
        %s1364 = ssub.s32 %s12, 2
        // Predicated region
        $region53: #{tpu_custom_call.1} parent=51 // pred_check
          %p1365 = pneg %p138
        $region54: #{tpu_custom_call.1} parent=51 // pred_check_branch
          %1367 = sbr.rel (%p1365) target = $region56
        $region55: #{tpu_custom_call.1} parent=51 // pred_region
          %s1368 = sand.u32 %s123, 1
          %s1369 = scalar_lea.sflag [#allocation3], %s1368
          %s1370 = sand.u32 %s123, 1
          %s1371 = smul.addr %s1370, 16
          %s1372 = scalar_lea.vmem [#allocation2], %s1371
          %1373 = dma.done %s1369, 256
        $region56: #{tpu_custom_call.1} parent=51 // pred_fallthru
          _
      $region52: #{tpu_custom_call.1} parent=5 // pred_fallthru
        _
    $region6: #{tpu_custom_call.1} parent=1 // loop_footer
      %s16 = sadd.s32 1, %s12
    $region7: #{tpu_custom_call.1} parent=1 // loop_footer_branch
      %11 = sbr.rel target = $region3
    $region8: #{tpu_custom_call.1} parent=1 // loop_exit
      _
    %1374 = vsyncpa [#allocation3], 1
    %s1375 = scalar_lea.sflag [#allocation3], 1
    %1376 = vsyncpa %s1375, 1

</llo_original>
